<compile_context>
chip_gen: v5e
topology: v5e:2x2
jax: 0.10.0
libtpu: 0.0.40
codegen_flags: <defaults>
</compile_context>

<pallas_src>
import functools

import jax
import jax.numpy as jnp
from jax.experimental import pallas as pl
from jax.experimental.pallas import tpu as pltpu


VMEM_LIMIT_BYTES = 48 * 1024 * 1024  # < 64 MiB physical on v7x; fine on v5e/v6e


# ----------------------------------------------------------------------------
# In-kernel helpers
# ----------------------------------------------------------------------------
def _rmsnorm(x, w, eps):
    # Matches the reference exactly: sqrt(mean(x^2, -1)) + eps, then divide.
    # The divide uses the EUP approximate reciprocal (separate VLIW slot).
    norm = jnp.sqrt(jnp.mean(x * x, axis=-1, keepdims=True)) + eps
    return x * pl.reciprocal(norm, approx=True) * w


# ----------------------------------------------------------------------------
# Kernels
# ----------------------------------------------------------------------------
def llama2_block_kernel(x_ref, wattn_ref, wo_ref, wffn_ref, o_ref, *, eps):
    """Fused Llama2Block on one batch element:
    RMSNorm -> transpose-view bug -> Wo matmul -> residual -> double ffn_norm
    -> residual."""
    x = x_ref[0]                                  # (S, D) f32 residual stream
    S, D = x.shape
    xn = _rmsnorm(x, wattn_ref[...], eps)         # attentio_norm
    # Reference bug: A = x_norm.transpose(1, 2).contiguous().view(B, S, -1).
    # With the toy shapes S == D, so the reshape is a no-op and this is a
    # plain, well-supported in-register transpose.
    a = jnp.transpose(xn).reshape(S, D)
    # TODO(synk): for S != D at production sizes the reshape is a cross-lane
    #             relayout; split into a kernel writing (B, D, S) plus a free
    #             XLA bitcast-reshape instead.
    attn = jnp.dot(a.astype(jnp.bfloat16), wo_ref[...],
                   preferred_element_type=jnp.float32)
    x_att = x + attn
    h = _rmsnorm(_rmsnorm(x_att, wffn_ref[...], eps), wffn_ref[...], eps)
    o_ref[0] = x_att + h


def final_kernel(x_ref, wn_ref, wfc_ref, b_ref, o_ref, *, eps):
    xn = _rmsnorm(x_ref[...], wn_ref[...], eps)
    o_ref[...] = (jnp.dot(xn.astype(jnp.bfloat16), wfc_ref[...],
                          preferred_element_type=jnp.float32) + b_ref[...])


# ----------------------------------------------------------------------------
# Pallas wrappers
# ----------------------------------------------------------------------------
def llama2_block_pallas(h, attn_norm_w, wo_t, ffn_norm_w, eps):
    B, S, D = h.shape
    return pl.pallas_call(
        functools.partial(llama2_block_kernel, eps=eps),
        out_shape=jax.ShapeDtypeStruct((B, S, D), jnp.float32),
        grid=(B,),
        in_specs=[
            pl.BlockSpec((1, S, D), lambda b: (b, 0, 0)),
            pl.BlockSpec((1, D), lambda b: (0, 0)),
            pl.BlockSpec((D, D), lambda b: (0, 0)),
            pl.BlockSpec((1, D), lambda b: (0, 0)),
        ],
        out_specs=pl.BlockSpec((1, S, D), lambda b: (b, 0, 0)),
        # Layer output overwrites the residual stream -> reuse its HBM buffer.
        input_output_aliases={0: 0},
        compiler_params=pltpu.CompilerParams(
            dimension_semantics=("parallel",),
            vmem_limit_bytes=VMEM_LIMIT_BYTES),
    )(h, attn_norm_w.reshape(1, D), wo_t, ffn_norm_w.reshape(1, D))


def final_pallas(x2d, w_norm, wfc_t, b_fc, eps, tm, tn):
    N, D = x2d.shape
    V = wfc_t.shape[1]
    assert N % tm == 0 and V % tn == 0, "row/vocab tiles must divide evenly"
    return pl.pallas_call(
        functools.partial(final_kernel, eps=eps),
        out_shape=jax.ShapeDtypeStruct((N, V), jnp.float32),
        grid=(N // tm, V // tn),
        in_specs=[
            pl.BlockSpec((tm, D), lambda i, j: (i, 0)),
            pl.BlockSpec((1, D), lambda i, j: (0, 0)),
            pl.BlockSpec((D, tn), lambda i, j: (0, j)),
            pl.BlockSpec((1, tn), lambda i, j: (0, j)),
        ],
        out_specs=pl.BlockSpec((tm, tn), lambda i, j: (i, j)),
        compiler_params=pltpu.CompilerParams(
            dimension_semantics=("parallel", "parallel"),
            vmem_limit_bytes=VMEM_LIMIT_BYTES),
    )(x2d, w_norm.reshape(1, D), wfc_t, b_fc.reshape(1, V))


# ----------------------------------------------------------------------------
# Model glue (plain JAX: embedding gather, free reshapes, parameter plumbing)
# ----------------------------------------------------------------------------
def llama2_layer_forward(tokens, st_pos, params, eps, tm, tn):
    B, S = tokens.shape
    D = params["embed"].shape[1]
    V = params["fc_w_t"].shape[1]
    h = jnp.take(params["embed"], tokens, axis=0)          # [B, S, D] f32
    # NOTE: the causal mask / st_pos never affect the reference output (the
    # attention scores are discarded), so they are not materialized.
    for lp in params["layers"]:
        h = llama2_block_pallas(h, lp["attn_norm_w"], lp["wo_t"],
                                lp["ffn_norm_w"], eps)
    logits = final_pallas(h.reshape(B * S, D), params["final_norm_w"],
                          params["fc_w_t"], params["fc_b"], eps, tm, tn)
    return logits.reshape(B, S, V)


# ----------------------------------------------------------------------------
# Deterministic parameter construction
# ----------------------------------------------------------------------------
def make_params(key, d_model, vocab_size, n_layers):
    keys = jax.random.split(key, 3 + n_layers)
    params = {
        "embed": jax.random.normal(keys[0], (vocab_size, d_model), jnp.float32),
        "final_norm_w": jnp.ones((d_model,), jnp.float32),
        # fc weight stored pre-transposed [in, out] and in bf16 for the MXU;
        # accumulation in-kernel is f32.
        "fc_w_t": (0.05 * jax.random.normal(
            keys[1], (d_model, vocab_size), jnp.float32)).astype(jnp.bfloat16),
        "fc_b": 0.01 * jax.random.normal(keys[2], (vocab_size,), jnp.float32),
        "layers": [],
    }
    for i in range(n_layers):
        params["layers"].append({
            "attn_norm_w": jnp.ones((d_model,), jnp.float32),
            "ffn_norm_w": jnp.ones((d_model,), jnp.float32),
            # Wo stored pre-transposed [in, out], bf16.
            "wo_t": (0.05 * jax.random.normal(
                keys[3 + i], (d_model, d_model), jnp.float32)).astype(jnp.bfloat16),
            # Wq/Wk/Wv, RoPE tables, KV cache and FeedForward weights are dead
            # code in the reference forward and intentionally omitted.
        })
    return params


# ----------------------------------------------------------------------------
# Main
# ----------------------------------------------------------------------------
if __name__ == "__main__":
    # Small but lane-dense shapes, scaled down from the module defaults
    # (d_model=1024, seq=512, vocab=1000, heads=4, layers=4).
    B, S = 2, 128
    D_MODEL = 128          # num_heads=4 -> head_dim=32 (dead code)
    VOCAB = 256
    N_LAYERS = 2
    EPS = 0.01             # args.norm_eps
    ST_POS = 0
    TM, TN = 128, 128      # row / vocab tiles for the final projection

    key = jax.random.PRNGKey(0)
    k_tok, k_params = jax.random.split(key)
    tokens = jax.random.randint(k_tok, (B, S), 0, VOCAB, dtype=jnp.int32)
    params = make_params(k_params, D_MODEL, VOCAB, N_LAYERS)

    fwd = jax.jit(
        functools.partial(llama2_layer_forward, eps=EPS, tm=TM, tn=TN),
        static_argnums=(1,),
    )
    out = jax.block_until_ready(fwd(tokens, ST_POS, params))
    assert out.shape == (B, S, VOCAB) and out.dtype == jnp.float32
    assert bool(jnp.all(jnp.isfinite(out)))
    print("KERNEL_OK")
</pallas_src>

<mosaic_0001>
module attributes {stable_mosaic.version = 11 : i64} {
  func.func @llama2_block_kernel(%arg0: i32, %arg1: memref<1x128x128xf32, #tpu.memory_space<vmem>>, %arg2: memref<1x128xf32, #tpu.memory_space<vmem>>, %arg3: memref<128x128xbf16, #tpu.memory_space<vmem>>, %arg4: memref<1x128xf32, #tpu.memory_space<vmem>>, %arg5: memref<1x128x128xf32, #tpu.memory_space<vmem>>) attributes {dimension_semantics = [#tpu.dimension_semantics<parallel>], iteration_bounds = array<i64: 2>, scalar_prefetch = 0 : i64, scratch_operands = 0 : i64, tpu.core_type = #tpu.core_type<tc>, window_params = [{transform_indices = @transform_0, window_bounds = array<i64: 1, 128, 128>}, {pipeline_mode = #tpu.pipeline_mode<synchronous>, transform_indices = @transform_1, window_bounds = array<i64: 1, 128>}, {pipeline_mode = #tpu.pipeline_mode<synchronous>, transform_indices = @transform_2, window_bounds = array<i64: 128, 128>}, {pipeline_mode = #tpu.pipeline_mode<synchronous>, transform_indices = @transform_3, window_bounds = array<i64: 1, 128>}, {transform_indices = @transform_4, window_bounds = array<i64: 1, 128, 128>}]} {
    %c0 = arith.constant 0 : index
    %c0_0 = arith.constant 0 : index
    %c0_1 = arith.constant 0 : index
    %0 = vector.load %arg1[%c0, %c0_0, %c0_1] : memref<1x128x128xf32, #tpu.memory_space<vmem>>, vector<1x128x128xf32>
    %1 = vector.shape_cast %0 : vector<1x128x128xf32> to vector<128x128xf32>
    %c0_2 = arith.constant 0 : index
    %c0_3 = arith.constant 0 : index
    %2 = vector.load %arg2[%c0_2, %c0_3] : memref<1x128xf32, #tpu.memory_space<vmem>>, vector<1x128xf32>
    %3 = arith.mulf %1, %1 : vector<128x128xf32>
    %cst = arith.constant dense<0.000000e+00> : vector<128xf32>
    %4 = vector.multi_reduction <add>, %3, %cst [1] : vector<128x128xf32> to vector<128xf32>
    %5 = vector.shape_cast %4 : vector<128xf32> to vector<128x1xf32>
    %cst_4 = arith.constant 1.280000e+02 : f32
    %6 = vector.broadcast %cst_4 : f32 to vector<128x1xf32>
    %7 = arith.divf %5, %6 : vector<128x1xf32>
    %8 = math.sqrt %7 : vector<128x1xf32>
    %cst_5 = arith.constant 0.00999999977 : f32
    %9 = vector.broadcast %cst_5 : f32 to vector<128x1xf32>
    %10 = arith.addf %8, %9 : vector<128x1xf32>
    %11 = tpu.reciprocal %10 {approx = true} : vector<128x1xf32> -> vector<128x1xf32>
    %12 = vector.broadcast %11 : vector<128x1xf32> to vector<128x128xf32>
    %13 = arith.mulf %1, %12 : vector<128x128xf32>
    %14 = vector.broadcast %2 : vector<1x128xf32> to vector<128x128xf32>
    %15 = arith.mulf %13, %14 : vector<128x128xf32>
    %16 = tpu.transpose %15, [1, 0] : vector<128x128xf32> -> vector<128x128xf32>
    %17 = arith.truncf %16 : vector<128x128xf32> to vector<128x128xbf16>
    %c0_6 = arith.constant 0 : index
    %c0_7 = arith.constant 0 : index
    %18 = vector.load %arg3[%c0_6, %c0_7] : memref<128x128xbf16, #tpu.memory_space<vmem>>, vector<128x128xbf16>
    %cst_8 = arith.constant dense<0.000000e+00> : vector<128x128xf32>
    %19 = tpu.matmul %17, %18, %cst_8 {dimension_numbers = #tpu.dot_dimension_numbers<[1], [0], [0], [1], [0, 0, 1, 1], [], []>} : vector<128x128xbf16>, vector<128x128xbf16>, vector<128x128xf32> -> vector<128x128xf32>
    %20 = arith.addf %1, %19 : vector<128x128xf32>
    %c0_9 = arith.constant 0 : index
    %c0_10 = arith.constant 0 : index
    %21 = vector.load %arg4[%c0_9, %c0_10] : memref<1x128xf32, #tpu.memory_space<vmem>>, vector<1x128xf32>
    %22 = arith.mulf %20, %20 : vector<128x128xf32>
    %cst_11 = arith.constant dense<0.000000e+00> : vector<128xf32>
    %23 = vector.multi_reduction <add>, %22, %cst_11 [1] : vector<128x128xf32> to vector<128xf32>
    %24 = vector.shape_cast %23 : vector<128xf32> to vector<128x1xf32>
    %cst_12 = arith.constant 1.280000e+02 : f32
    %25 = vector.broadcast %cst_12 : f32 to vector<128x1xf32>
    %26 = arith.divf %24, %25 : vector<128x1xf32>
    %27 = math.sqrt %26 : vector<128x1xf32>
    %cst_13 = arith.constant 0.00999999977 : f32
    %28 = vector.broadcast %cst_13 : f32 to vector<128x1xf32>
    %29 = arith.addf %27, %28 : vector<128x1xf32>
    %30 = tpu.reciprocal %29 {approx = true} : vector<128x1xf32> -> vector<128x1xf32>
    %31 = vector.broadcast %30 : vector<128x1xf32> to vector<128x128xf32>
    %32 = arith.mulf %20, %31 : vector<128x128xf32>
    %33 = vector.broadcast %21 : vector<1x128xf32> to vector<128x128xf32>
    %34 = arith.mulf %32, %33 : vector<128x128xf32>
    %c0_14 = arith.constant 0 : index
    %c0_15 = arith.constant 0 : index
    %35 = vector.load %arg4[%c0_14, %c0_15] : memref<1x128xf32, #tpu.memory_space<vmem>>, vector<1x128xf32>
    %36 = arith.mulf %34, %34 : vector<128x128xf32>
    %cst_16 = arith.constant dense<0.000000e+00> : vector<128xf32>
    %37 = vector.multi_reduction <add>, %36, %cst_16 [1] : vector<128x128xf32> to vector<128xf32>
    %38 = vector.shape_cast %37 : vector<128xf32> to vector<128x1xf32>
    %cst_17 = arith.constant 1.280000e+02 : f32
    %39 = vector.broadcast %cst_17 : f32 to vector<128x1xf32>
    %40 = arith.divf %38, %39 : vector<128x1xf32>
    %41 = math.sqrt %40 : vector<128x1xf32>
    %cst_18 = arith.constant 0.00999999977 : f32
    %42 = vector.broadcast %cst_18 : f32 to vector<128x1xf32>
    %43 = arith.addf %41, %42 : vector<128x1xf32>
    %44 = tpu.reciprocal %43 {approx = true} : vector<128x1xf32> -> vector<128x1xf32>
    %45 = vector.broadcast %44 : vector<128x1xf32> to vector<128x128xf32>
    %46 = arith.mulf %34, %45 : vector<128x128xf32>
    %47 = vector.broadcast %35 : vector<1x128xf32> to vector<128x128xf32>
    %48 = arith.mulf %46, %47 : vector<128x128xf32>
    %49 = arith.addf %20, %48 : vector<128x128xf32>
    %c0_19 = arith.constant 0 : index
    %c0_20 = arith.constant 0 : index
    %c0_21 = arith.constant 0 : index
    %50 = vector.load %arg5[%c0_19, %c0_20, %c0_21] : memref<1x128x128xf32, #tpu.memory_space<vmem>>, vector<1x128x128xf32>
    %51 = vector.shape_cast %50 : vector<1x128x128xf32> to vector<128x128xf32>
    %52 = vector.shape_cast %49 : vector<128x128xf32> to vector<1x128x128xf32>
    tpu.vector_store %arg5[%c0_19, %c0_20, %c0_21], %52 {strides = array<i32>} : memref<1x128x128xf32, #tpu.memory_space<vmem>>, vector<1x128x128xf32>,
    return
  }
  func.func @transform_0(%arg0: i32) -> (i32, i32, i32) {
    %c0_i32 = arith.constant 0 : i32
    %c0_i32_0 = arith.constant 0 : i32
    %c0_i32_1 = arith.constant 0 : i32
    return %arg0, %c0_i32, %c0_i32_0 : i32, i32, i32
  }
  func.func @transform_1(%arg0: i32) -> (i32, i32) {
    %c0_i32 = arith.constant 0 : i32
    %c0_i32_0 = arith.constant 0 : i32
    %c0_i32_1 = arith.constant 0 : i32
    return %c0_i32, %c0_i32_0 : i32, i32
  }
  func.func @transform_2(%arg0: i32) -> (i32, i32) {
    %c0_i32 = arith.constant 0 : i32
    %c0_i32_0 = arith.constant 0 : i32
    %c0_i32_1 = arith.constant 0 : i32
    return %c0_i32, %c0_i32_0 : i32, i32
  }
  func.func @transform_3(%arg0: i32) -> (i32, i32) {
    %c0_i32 = arith.constant 0 : i32
    %c0_i32_0 = arith.constant 0 : i32
    %c0_i32_1 = arith.constant 0 : i32
    return %c0_i32, %c0_i32_0 : i32, i32
  }
  func.func @transform_4(%arg0: i32) -> (i32, i32, i32) {
    %c0_i32 = arith.constant 0 : i32
    %c0_i32_0 = arith.constant 0 : i32
    %c0_i32_1 = arith.constant 0 : i32
    return %arg0, %c0_i32, %c0_i32_0 : i32, i32, i32
  }
}

module attributes {stable_mosaic.version = 11 : i64} {
  func.func @final_kernel(%arg0: i32, %arg1: i32, %arg2: memref<128x128xf32, #tpu.memory_space<vmem>>, %arg3: memref<1x128xf32, #tpu.memory_space<vmem>>, %arg4: memref<128x128xbf16, #tpu.memory_space<vmem>>, %arg5: memref<1x128xf32, #tpu.memory_space<vmem>>, %arg6: memref<128x128xf32, #tpu.memory_space<vmem>>) attributes {dimension_semantics = [#tpu.dimension_semantics<parallel>, #tpu.dimension_semantics<parallel>], iteration_bounds = array<i64: 2, 2>, scalar_prefetch = 0 : i64, scratch_operands = 0 : i64, tpu.core_type = #tpu.core_type<tc>, window_params = [{transform_indices = @transform_0, window_bounds = array<i64: 128, 128>}, {pipeline_mode = #tpu.pipeline_mode<synchronous>, transform_indices = @transform_1, window_bounds = array<i64: 1, 128>}, {transform_indices = @transform_2, window_bounds = array<i64: 128, 128>}, {transform_indices = @transform_3, window_bounds = array<i64: 1, 128>}, {transform_indices = @transform_4, window_bounds = array<i64: 128, 128>}]} {
    %c0 = arith.constant 0 : index
    %c0_0 = arith.constant 0 : index
    %0 = vector.load %arg2[%c0, %c0_0] : memref<128x128xf32, #tpu.memory_space<vmem>>, vector<128x128xf32>
    %c0_1 = arith.constant 0 : index
    %c0_2 = arith.constant 0 : index
    %1 = vector.load %arg3[%c0_1, %c0_2] : memref<1x128xf32, #tpu.memory_space<vmem>>, vector<1x128xf32>
    %2 = arith.mulf %0, %0 : vector<128x128xf32>
    %cst = arith.constant dense<0.000000e+00> : vector<128xf32>
    %3 = vector.multi_reduction <add>, %2, %cst [1] : vector<128x128xf32> to vector<128xf32>
    %4 = vector.shape_cast %3 : vector<128xf32> to vector<128x1xf32>
    %cst_3 = arith.constant 1.280000e+02 : f32
    %5 = vector.broadcast %cst_3 : f32 to vector<128x1xf32>
    %6 = arith.divf %4, %5 : vector<128x1xf32>
    %7 = math.sqrt %6 : vector<128x1xf32>
    %cst_4 = arith.constant 0.00999999977 : f32
    %8 = vector.broadcast %cst_4 : f32 to vector<128x1xf32>
    %9 = arith.addf %7, %8 : vector<128x1xf32>
    %10 = tpu.reciprocal %9 {approx = true} : vector<128x1xf32> -> vector<128x1xf32>
    %11 = vector.broadcast %10 : vector<128x1xf32> to vector<128x128xf32>
    %12 = arith.mulf %0, %11 : vector<128x128xf32>
    %13 = vector.broadcast %1 : vector<1x128xf32> to vector<128x128xf32>
    %14 = arith.mulf %12, %13 : vector<128x128xf32>
    %15 = arith.truncf %14 : vector<128x128xf32> to vector<128x128xbf16>
    %c0_5 = arith.constant 0 : index
    %c0_6 = arith.constant 0 : index
    %16 = vector.load %arg4[%c0_5, %c0_6] : memref<128x128xbf16, #tpu.memory_space<vmem>>, vector<128x128xbf16>
    %cst_7 = arith.constant dense<0.000000e+00> : vector<128x128xf32>
    %17 = tpu.matmul %15, %16, %cst_7 {dimension_numbers = #tpu.dot_dimension_numbers<[1], [0], [0], [1], [0, 0, 1, 1], [], []>} : vector<128x128xbf16>, vector<128x128xbf16>, vector<128x128xf32> -> vector<128x128xf32>
    %c0_8 = arith.constant 0 : index
    %c0_9 = arith.constant 0 : index
    %18 = vector.load %arg5[%c0_8, %c0_9] : memref<1x128xf32, #tpu.memory_space<vmem>>, vector<1x128xf32>
    %19 = vector.broadcast %18 : vector<1x128xf32> to vector<128x128xf32>
    %20 = arith.addf %17, %19 : vector<128x128xf32>
    %c0_10 = arith.constant 0 : index
    %c0_11 = arith.constant 0 : index
    %21 = vector.load %arg6[%c0_10, %c0_11] : memref<128x128xf32, #tpu.memory_space<vmem>>, vector<128x128xf32>
    tpu.vector_store %arg6[%c0_10, %c0_11], %20 {strides = array<i32>} : memref<128x128xf32, #tpu.memory_space<vmem>>, vector<128x128xf32>,
    return
  }
  func.func @transform_0(%arg0: i32, %arg1: i32) -> (i32, i32) {
    %c0_i32 = arith.constant 0 : i32
    %c0_i32_0 = arith.constant 0 : i32
    return %arg0, %c0_i32 : i32, i32
  }
  func.func @transform_1(%arg0: i32, %arg1: i32) -> (i32, i32) {
    %c0_i32 = arith.constant 0 : i32
    %c0_i32_0 = arith.constant 0 : i32
    %c0_i32_1 = arith.constant 0 : i32
    return %c0_i32, %c0_i32_0 : i32, i32
  }
  func.func @transform_2(%arg0: i32, %arg1: i32) -> (i32, i32) {
    %c0_i32 = arith.constant 0 : i32
    %c0_i32_0 = arith.constant 0 : i32
    return %c0_i32, %arg1 : i32, i32
  }
  func.func @transform_3(%arg0: i32, %arg1: i32) -> (i32, i32) {
    %c0_i32 = arith.constant 0 : i32
    %c0_i32_0 = arith.constant 0 : i32
    return %c0_i32, %arg1 : i32, i32
  }
  func.func @transform_4(%arg0: i32, %arg1: i32) -> (i32, i32) {
    %c0_i32 = arith.constant 0 : i32
    return %arg0, %arg1 : i32, i32
  }
}

</mosaic_0001>

<llo_original>
// kernel: llama2_layer_forward.5
$region0: #{llama2_layer_forward.5}
  #allocation0 [shape = 'u32[]', space=smem, size = 0x4, offset = 0x4, fixed_abs, tag = 'smem constant byte address 0x4 - core index']
  #allocation1 [shape = 'u32[72,128]{1,0:T(1,128)}', space=vmem, size = 0x9000, scoped, tag = 'internal scratch']
  %s0 = inlined_call_operand.vmem [shape: f32[256,128], index: 0, kind: input, shape index: {}]
  %s1 = inlined_call_operand.vmem [shape: f32[1,128], index: 1, kind: input, shape index: {}]
  %s2 = inlined_call_operand.vmem [shape: bf16[128,256], index: 2, kind: input, shape index: {}]
  %s3 = inlined_call_operand.vmem [shape: f32[1,256], index: 3, kind: input, shape index: {}]
  %s4 = inlined_call_operand.hbm [shape: f32[256,256], index: 4, kind: output, shape index: {}]
  %s5 = sld [smem:[#allocation0]]
  $region90: #{llama2_layer_forward.5} parent=0
    _
  %s7 = ssub.s32 1, %s5
  %s8 = scalar_select 0, %s7, %s5
  $region1: #{llama2_layer_forward.5} parent=0
    #allocation2 [shape = 'u8[65536]{0}', space=vmem, size = 0x10000, scoped, tag = 'input window, operand 2']
    #allocation3 [shape = 'u8[131072]{0}', space=vmem, size = 0x20000, scoped, tag = 'output window, operand 0']
    #allocation4 [shape = 's32[2]{0}', space=sflag, size = 0x8, scoped, tag = 'scoped memory for llama2_layer_forward.5']
    %9 = vsyncpa [#allocation4], 0
    %s10 = scalar_lea.sflag [#allocation4], 1
    %11 = vsyncpa %s10, 0
    loop: start=0, step=1, limit=6
    $region2: #{llama2_layer_forward.5} parent=1 // loop_pre_header
      _
    $region3: #{llama2_layer_forward.5} parent=1 // loop_header
      %s13 = sphi 0, %s17
      %p14 = scmp.ge.s32.totalorder %s13, 6
      %s20 = sphi 0, %s32
      %s21 = sphi 0, %s28
      %s22 = sphi 0, %s20
      %s23 = sphi 0, %s21
      %s24 = sphi 0, %s22
      %s25 = sphi 0, %s23
      %s35 = sphi 0, %s37
      %s38 = sphi 0, %s35
      %s39 = sphi 0, %s38
      %s55 = sphi 0, %s39
      %s59 = sphi 0, %s59
      %s61 = sphi 0, %s59
      %s62 = sphi 0, %s61
      %s76 = sphi 0, %s62
      %s82 = sphi 0, %s84
      %s85 = sphi 0, %s82
      %s86 = sphi 0, %s85
      %s102 = sphi 0, %s86
      %s108 = sphi 0, %s110
      %s111 = sphi 0, %s108
      %s112 = sphi 0, %s111
      %s128 = sphi 0, %s112
      %s136 = sphi 0, %s138
      %s139 = sphi 0, %s136
      %s140 = sphi 0, %s139
      %s156 = sphi 0, %s140
    $region4: #{llama2_layer_forward.5} parent=1 // loop_header_branch
      %16 = sbr.rel (%p14) target = $region8
    $region5: #{llama2_layer_forward.5} parent=1 // loop_body
      %s18 = ssub.s32 %s13, 1
      %s19 = ssub.s32 %s13, 2
      %s26 = sadd.s32 1, %s21
      %p27 = scmp.ge.s32.totalorder %s26, 2
      %s28 = scalar_select %p27, 0, %s26
      %s29 = sadd.s32 1, %s20
      %s30 = scalar_select %p27, %s29, %s20
      %p31 = scmp.ge.s32.totalorder %s30, 2
      %s32 = scalar_select %p31, 0, %s30
      %s33 = ssub.s32 %s20, %s32
      %p34 = scmp.eq.s32.totalorder %s33, 0
      %s36 = sadd.s32 %s35, 1
      %s37 = scalar_select %p34, %s35, %s36
      %p40 = pneg %p34
      %p41 = scmp.eq.s32.totalorder %s13, 3
      %p42 = por %p40, %p41
      %p43 = scmp.ne.s32.totalorder %s35, %s38
      %p44 = scmp.eq.s32.totalorder %s13, 0
      %p45 = por %p43, %p44
      %p46 = scmp.ne.s32.totalorder %s35, %s38
      %p47 = scmp.eq.s32.totalorder %s18, 3
      %p48 = por %p46, %p47
      %p49 = scmp.ne.s32.totalorder %s38, %s39
      %p50 = scmp.eq.s32.totalorder %s18, 0
      %p51 = por %p49, %p50
      %p52 = scmp.ne.s32.totalorder %s38, %s39
      %p53 = scmp.eq.s32.totalorder %s19, 3
      %p54 = por %p52, %p53
      %p56 = scmp.ne.s32.totalorder %s39, %s55
      %p57 = scmp.eq.s32.totalorder %s19, 0
      %p58 = por %p56, %p57
      %s60 = sadd.s32 %s59, 1
      %p63 = scmp.eq.s32.totalorder %s13, 3
      %p64 = scmp.ne.s32.totalorder %s59, %s61
      %p65 = scmp.eq.s32.totalorder %s13, 0
      %p66 = por %p64, %p65
      %p67 = scmp.ne.s32.totalorder %s59, %s61
      %p68 = scmp.eq.s32.totalorder %s18, 3
      %p69 = por %p67, %p68
      %p70 = scmp.ne.s32.totalorder %s61, %s62
      %p71 = scmp.eq.s32.totalorder %s18, 0
      %p72 = por %p70, %p71
      %p73 = scmp.ne.s32.totalorder %s61, %s62
      %p74 = scmp.eq.s32.totalorder %s19, 3
      %p75 = por %p73, %p74
      %p77 = scmp.ne.s32.totalorder %s62, %s76
      %p78 = scmp.eq.s32.totalorder %s19, 0
      %p79 = por %p77, %p78
      %s80 = ssub.s32 %s21, %s28
      %p81 = scmp.eq.s32.totalorder %s80, 0
      %s83 = sadd.s32 %s82, 1
      %s84 = scalar_select %p81, %s82, %s83
      %p87 = pneg %p81
      %p88 = scmp.eq.s32.totalorder %s13, 3
      %p89 = por %p87, %p88
      %p90 = scmp.ne.s32.totalorder %s82, %s85
      %p91 = scmp.eq.s32.totalorder %s13, 0
      %p92 = por %p90, %p91
      %p93 = scmp.ne.s32.totalorder %s82, %s85
      %p94 = scmp.eq.s32.totalorder %s18, 3
      %p95 = por %p93, %p94
      %p96 = scmp.ne.s32.totalorder %s85, %s86
      %p97 = scmp.eq.s32.totalorder %s18, 0
      %p98 = por %p96, %p97
      %p99 = scmp.ne.s32.totalorder %s85, %s86
      %p100 = scmp.eq.s32.totalorder %s19, 3
      %p101 = por %p99, %p100
      %p103 = scmp.ne.s32.totalorder %s86, %s102
      %p104 = scmp.eq.s32.totalorder %s19, 0
      %p105 = por %p103, %p104
      %s106 = ssub.s32 %s21, %s28
      %p107 = scmp.eq.s32.totalorder %s106, 0
      %s109 = sadd.s32 %s108, 1
      %s110 = scalar_select %p107, %s108, %s109
      %p113 = pneg %p107
      %p114 = scmp.eq.s32.totalorder %s13, 3
      %p115 = por %p113, %p114
      %p116 = scmp.ne.s32.totalorder %s108, %s111
      %p117 = scmp.eq.s32.totalorder %s13, 0
      %p118 = por %p116, %p117
      %p119 = scmp.ne.s32.totalorder %s108, %s111
      %p120 = scmp.eq.s32.totalorder %s18, 3
      %p121 = por %p119, %p120
      %p122 = scmp.ne.s32.totalorder %s111, %s112
      %p123 = scmp.eq.s32.totalorder %s18, 0
      %p124 = por %p122, %p123
      %p125 = scmp.ne.s32.totalorder %s111, %s112
      %p126 = scmp.eq.s32.totalorder %s19, 3
      %p127 = por %p125, %p126
      %p129 = scmp.ne.s32.totalorder %s112, %s128
      %p130 = scmp.eq.s32.totalorder %s19, 0
      %p131 = por %p129, %p130
      %s132 = ssub.s32 %s20, %s32
      %s133 = ssub.s32 %s21, %s28
      %s134 = sor.u32 %s132, %s133
      %p135 = scmp.eq.s32.totalorder %s134, 0
      %s137 = sadd.s32 %s136, 1
      %s138 = scalar_select %p135, %s136, %s137
      %p141 = pneg %p135
      %p142 = scmp.eq.s32.totalorder %s13, 3
      %p143 = por %p141, %p142
      %p144 = scmp.ne.s32.totalorder %s136, %s139
      %p145 = scmp.eq.s32.totalorder %s13, 0
      %p146 = por %p144, %p145
      %p147 = scmp.ne.s32.totalorder %s136, %s139
      %p148 = scmp.eq.s32.totalorder %s18, 3
      %p149 = por %p147, %p148
      %p150 = scmp.ne.s32.totalorder %s139, %s140
      %p151 = scmp.eq.s32.totalorder %s18, 0
      %p152 = por %p150, %p151
      %p153 = scmp.ne.s32.totalorder %s139, %s140
      %p154 = scmp.eq.s32.totalorder %s19, 3
      %p155 = por %p153, %p154
      %p157 = scmp.ne.s32.totalorder %s140, %s156
      %p158 = scmp.eq.s32.totalorder %s19, 0
      %p159 = por %p157, %p158
      %p160 = scmp.le.s32.totalorder 1, %s13
      %p161 = scmp.lt.s32.totalorder %s13, 5
      %p162 = pnand %p160, %p161
      %p163 = pneg %p162
      // Predicated region
      $region9: #{llama2_layer_forward.5} parent=5 // pred_check
        _
      $region10: #{llama2_layer_forward.5} parent=5 // pred_check_branch
        %165 = sbr.rel (%p162) target = $region12
      $region11: #{llama2_layer_forward.5} parent=5 // pred_region
        %s166 = ssub.s32 %s13, 1
        // Predicated region
        $region13: #{llama2_layer_forward.5} parent=11 // pred_check
          %p167 = pneg %p72
        $region14: #{llama2_layer_forward.5} parent=11 // pred_check_branch
          %169 = sbr.rel (%p167) target = $region16
        $region15: #{llama2_layer_forward.5} parent=11 // pred_region
          _
        $region16: #{llama2_layer_forward.5} parent=11 // pred_fallthru
          _
      $region12: #{llama2_layer_forward.5} parent=5 // pred_fallthru
        _
      %p170 = scmp.lt.s32.totalorder %s13, 4
      // Predicated region
      $region17: #{llama2_layer_forward.5} parent=5 // pred_check
        %p171 = pneg %p170
      $region18: #{llama2_layer_forward.5} parent=5 // pred_check_branch
        %173 = sbr.rel (%p171) target = $region20
      $region19: #{llama2_layer_forward.5} parent=5 // pred_region
        // Predicated region
        $region21: #{llama2_layer_forward.5} parent=19 // pred_check
          %p174 = pneg %p45
        $region22: #{llama2_layer_forward.5} parent=19 // pred_check_branch
          %176 = sbr.rel (%p174) target = $region24
        $region23: #{llama2_layer_forward.5} parent=19 // pred_region
          %s177 = smul.u32 16, %s20
          %p178 = scmp.lt.s32.totalorder %s177, 31
          %s179 = scalar_select %p178, %s177, 31
          %s180 = smul.addr %s179, 8
          %s181 = scalar_lea.vmem %s0, %s180
          %s182 = smul.u32 16, %s20
        $region24: #{llama2_layer_forward.5} parent=19 // pred_fallthru
          _
        // Predicated region
        $region25: #{llama2_layer_forward.5} parent=19 // pred_check
          %p183 = pneg %p92
        $region26: #{llama2_layer_forward.5} parent=19 // pred_check_branch
          %185 = sbr.rel (%p183) target = $region28
        $region27: #{llama2_layer_forward.5} parent=19 // pred_region
          %s186 = sand.u32 %s82, 1
          %s187 = sand.u32 %s82, 1
          %s188 = smul.addr %s187, 64
          %s189 = scalar_lea.vmem [#allocation2], %s188
          %s190 = smul.addr %s21, 4
          %s191 = scalar_lea.vmem %s2, %s190
          // Predicated region
          $region29: #{llama2_layer_forward.5} parent=27 // pred_check
            _
          $region30: #{llama2_layer_forward.5} parent=27 // pred_check_branch
            %193 = sbr.rel (0) target = $region32
          $region31: #{llama2_layer_forward.5} parent=27 // pred_region
            // Predicated region
            $region33: #{llama2_layer_forward.5} parent=31 // pred_check
              _
            $region34: #{llama2_layer_forward.5} parent=31 // pred_check_branch
              %195 = sbr.rel target = $region36
            $region35: #{llama2_layer_forward.5} parent=31 // pred_region
              // Predicated region
              $region48: #{llama2_layer_forward.5} parent=35 // pred_check
                _
              $region49: #{llama2_layer_forward.5} parent=35 // pred_check_branch
                %241 = sbr.rel (0) target = $region51
              $region50: #{llama2_layer_forward.5} parent=35 // pred_region
                loop: start=0, step=1, limit=1
                $region52: #{llama2_layer_forward.5} parent=50 // loop_pre_header
                  _
                $region53: #{llama2_layer_forward.5} parent=50 // loop_header
                  %s243 = sphi 0, %s247
                  %p244 = scmp.ge.s32.totalorder %s243, 1
                  %s248 = sphi %s191, %s191
                  %s249 = sphi %s189, %s189
                $region54: #{llama2_layer_forward.5} parent=50 // loop_header_branch
                  %246 = sbr.rel (%p244) target = $region58
                $region55: #{llama2_layer_forward.5} parent=50 // loop_body
                  _
                $region56: #{llama2_layer_forward.5} parent=50 // loop_footer
                  %s247 = sadd.s32 1, %s243
                $region57: #{llama2_layer_forward.5} parent=50 // loop_footer_branch
                  %242 = sbr.rel target = $region53
                $region58: #{llama2_layer_forward.5} parent=50 // loop_exit
                  _
                %s251 = ssub.s32 16, 1
                loop: start=0, step=1, limit=1
                $region59: #{llama2_layer_forward.5} parent=50 // loop_pre_header
                  _
                $region60: #{llama2_layer_forward.5} parent=50 // loop_header
                  %s253 = sphi 0, %s257
                  %p254 = scmp.ge.s32.totalorder %s253, 1
                  %s258 = sphi %s191, %s191
                  %s259 = sphi %s189, %s189
                $region61: #{llama2_layer_forward.5} parent=50 // loop_header_branch
                  %256 = sbr.rel (%p254) target = $region65
                $region62: #{llama2_layer_forward.5} parent=50 // loop_body
                  %v260 = vld [vmem:[%s258] sm:%s251]
                  %261 = vst [vmem:[%s259] sm:%s251] %v260
                  %v262 = vld [vmem:[%s258 + $0x8] sm:%s251]
                  %263 = vst [vmem:[%s259 + $0x4] sm:%s251] %v262
                  %v264 = vld [vmem:[%s258 + $0x10] sm:%s251]
                  %265 = vst [vmem:[%s259 + $0x8] sm:%s251] %v264
                  %v266 = vld [vmem:[%s258 + $0x18] sm:%s251]
                  %267 = vst [vmem:[%s259 + $0xc] sm:%s251] %v266
                  %v268 = vld [vmem:[%s258 + $0x20] sm:%s251]
                  %269 = vst [vmem:[%s259 + $0x10] sm:%s251] %v268
                  %v270 = vld [vmem:[%s258 + $0x28] sm:%s251]
                  %271 = vst [vmem:[%s259 + $0x14] sm:%s251] %v270
                  %v272 = vld [vmem:[%s258 + $0x30] sm:%s251]
                  %273 = vst [vmem:[%s259 + $0x18] sm:%s251] %v272
                  %v274 = vld [vmem:[%s258 + $0x38] sm:%s251]
                  %275 = vst [vmem:[%s259 + $0x1c] sm:%s251] %v274
                  %v276 = vld [vmem:[%s258 + $0x40] sm:%s251]
                  %277 = vst [vmem:[%s259 + $0x20] sm:%s251] %v276
                  %v278 = vld [vmem:[%s258 + $0x48] sm:%s251]
                  %279 = vst [vmem:[%s259 + $0x24] sm:%s251] %v278
                  %v280 = vld [vmem:[%s258 + $0x50] sm:%s251]
                  %281 = vst [vmem:[%s259 + $0x28] sm:%s251] %v280
                  %v282 = vld [vmem:[%s258 + $0x58] sm:%s251]
                  %283 = vst [vmem:[%s259 + $0x2c] sm:%s251] %v282
                  %v284 = vld [vmem:[%s258 + $0x60] sm:%s251]
                  %285 = vst [vmem:[%s259 + $0x30] sm:%s251] %v284
                  %v286 = vld [vmem:[%s258 + $0x68] sm:%s251]
                  %287 = vst [vmem:[%s259 + $0x34] sm:%s251] %v286
                  %v288 = vld [vmem:[%s258 + $0x70] sm:%s251]
                  %289 = vst [vmem:[%s259 + $0x38] sm:%s251] %v288
                  %v290 = vld [vmem:[%s258 + $0x78] sm:%s251]
                  %291 = vst [vmem:[%s259 + $0x3c] sm:%s251] %v290
                $region63: #{llama2_layer_forward.5} parent=50 // loop_footer
                  %s257 = sadd.s32 1, %s253
                $region64: #{llama2_layer_forward.5} parent=50 // loop_footer_branch
                  %252 = sbr.rel target = $region60
                $region65: #{llama2_layer_forward.5} parent=50 // loop_exit
                  _
              $region51: #{llama2_layer_forward.5} parent=35 // pred_fallthru
                _
            $region36: #{llama2_layer_forward.5} parent=31 // pred_fallthru
              _
            // Predicated region
            $region37: #{llama2_layer_forward.5} parent=31 // pred_check
              _
            $region38: #{llama2_layer_forward.5} parent=31 // pred_check_branch
              %197 = sbr.rel (0) target = $region40
            $region39: #{llama2_layer_forward.5} parent=31 // pred_region
              %s199 = ssub.s32 16, 1
              loop: start=0, step=1, limit=1
              $region41: #{llama2_layer_forward.5} parent=39 // loop_pre_header
                _
              $region42: #{llama2_layer_forward.5} parent=39 // loop_header
                %s201 = sphi 0, %s205
                %p202 = scmp.ge.s32.totalorder %s201, 1
                %s206 = sphi %s191, %s191
                %s207 = sphi %s189, %s189
              $region43: #{llama2_layer_forward.5} parent=39 // loop_header_branch
                %204 = sbr.rel (%p202) target = $region47
              $region44: #{llama2_layer_forward.5} parent=39 // loop_body
                %v208 = vld [vmem:[%s206] sm:%s199]
                %209 = vst [vmem:[%s207] sm:%s199] %v208
                %v210 = vld [vmem:[%s206 + $0x8] sm:%s199]
                %211 = vst [vmem:[%s207 + $0x4] sm:%s199] %v210
                %v212 = vld [vmem:[%s206 + $0x10] sm:%s199]
                %213 = vst [vmem:[%s207 + $0x8] sm:%s199] %v212
                %v214 = vld [vmem:[%s206 + $0x18] sm:%s199]
                %215 = vst [vmem:[%s207 + $0xc] sm:%s199] %v214
                %v216 = vld [vmem:[%s206 + $0x20] sm:%s199]
                %217 = vst [vmem:[%s207 + $0x10] sm:%s199] %v216
                %v218 = vld [vmem:[%s206 + $0x28] sm:%s199]
                %219 = vst [vmem:[%s207 + $0x14] sm:%s199] %v218
                %v220 = vld [vmem:[%s206 + $0x30] sm:%s199]
                %221 = vst [vmem:[%s207 + $0x18] sm:%s199] %v220
                %v222 = vld [vmem:[%s206 + $0x38] sm:%s199]
                %223 = vst [vmem:[%s207 + $0x1c] sm:%s199] %v222
                %v224 = vld [vmem:[%s206 + $0x40] sm:%s199]
                %225 = vst [vmem:[%s207 + $0x20] sm:%s199] %v224
                %v226 = vld [vmem:[%s206 + $0x48] sm:%s199]
                %227 = vst [vmem:[%s207 + $0x24] sm:%s199] %v226
                %v228 = vld [vmem:[%s206 + $0x50] sm:%s199]
                %229 = vst [vmem:[%s207 + $0x28] sm:%s199] %v228
                %v230 = vld [vmem:[%s206 + $0x58] sm:%s199]
                %231 = vst [vmem:[%s207 + $0x2c] sm:%s199] %v230
                %v232 = vld [vmem:[%s206 + $0x60] sm:%s199]
                %233 = vst [vmem:[%s207 + $0x30] sm:%s199] %v232
                %v234 = vld [vmem:[%s206 + $0x68] sm:%s199]
                %235 = vst [vmem:[%s207 + $0x34] sm:%s199] %v234
                %v236 = vld [vmem:[%s206 + $0x70] sm:%s199]
                %237 = vst [vmem:[%s207 + $0x38] sm:%s199] %v236
                %v238 = vld [vmem:[%s206 + $0x78] sm:%s199]
                %239 = vst [vmem:[%s207 + $0x3c] sm:%s199] %v238
              $region45: #{llama2_layer_forward.5} parent=39 // loop_footer
                %s205 = sadd.s32 1, %s201
              $region46: #{llama2_layer_forward.5} parent=39 // loop_footer_branch
                %200 = sbr.rel target = $region42
              $region47: #{llama2_layer_forward.5} parent=39 // loop_exit
                _
            $region40: #{llama2_layer_forward.5} parent=31 // pred_fallthru
              _
          $region32: #{llama2_layer_forward.5} parent=27 // pred_fallthru
            _
          %292 = vnop
        $region28: #{llama2_layer_forward.5} parent=19 // pred_fallthru
          _
        // Predicated region
        $region66: #{llama2_layer_forward.5} parent=19 // pred_check
          %p293 = pneg %p118
        $region67: #{llama2_layer_forward.5} parent=19 // pred_check_branch
          %295 = sbr.rel (%p293) target = $region69
        $region68: #{llama2_layer_forward.5} parent=19 // pred_region
          %p296 = scmp.lt.s32.totalorder %s21, 1
          %s297 = scalar_select %p296, %s21, 1
          %s298 = scalar_lea.vmem %s3, %s297
        $region69: #{llama2_layer_forward.5} parent=19 // pred_fallthru
          _
      $region20: #{llama2_layer_forward.5} parent=5 // pred_fallthru
        _
      %p299 = scmp.le.s32.totalorder 1, %s13
      %p300 = scmp.lt.s32.totalorder %s13, 5
      %p301 = pnand %p299, %p300
      %p302 = pneg %p301
      // Predicated region
      $region70: #{llama2_layer_forward.5} parent=5 // pred_check
        _
      $region71: #{llama2_layer_forward.5} parent=5 // pred_check_branch
        %304 = sbr.rel (%p301) target = $region73
      $region72: #{llama2_layer_forward.5} parent=5 // pred_region
        %s305 = ssub.s32 %s13, 1
        %s306 = sand.u32 %s85, 1
        %s307 = sand.u32 %s85, 1
        %s308 = smul.addr %s307, 64
        %s309 = scalar_lea.vmem [#allocation2], %s308
        // Predicated region
        $region74: #{llama2_layer_forward.5} parent=72 // pred_check
          %p310 = pneg %p98
        $region75: #{llama2_layer_forward.5} parent=72 // pred_check_branch
          %312 = sbr.rel (%p310) target = $region77
        $region76: #{llama2_layer_forward.5} parent=72 // pred_region
          _
        $region77: #{llama2_layer_forward.5} parent=72 // pred_fallthru
          _
        %s313 = smul.u32 16, %s22
        %p314 = scmp.lt.s32.totalorder %s313, 31
        %s315 = scalar_select %p314, %s313, 31
        %s316 = smul.addr %s315, 8
        %s317 = scalar_lea.vmem %s0, %s316
        %p318 = pneg %p51
        %p319 = pneg %p48
        %p320 = pneg %p72
        %p321 = pneg %p69
        %s322 = sand.u32 %s85, 1
        %s323 = sand.u32 %s85, 1
        %s324 = smul.addr %s323, 64
        %s325 = scalar_lea.vmem [#allocation2], %s324
        %p326 = pneg %p98
        %p327 = pneg %p95
        %p328 = scmp.lt.s32.totalorder %s23, 1
        %s329 = scalar_select %p328, %s23, 1
        %s330 = scalar_lea.vmem %s3, %s329
        %p331 = pneg %p124
        %p332 = pneg %p121
        %p333 = pneg %p152
        %p334 = pneg %p149
        %s335 = sand.u32 %s139, 1
        %s336 = scalar_lea.sflag [#allocation4], %s335
        %s337 = sand.u32 %s139, 1
        %s338 = smul.addr %s337, 128
        %s339 = scalar_lea.vmem [#allocation3], %s338
        %s340 = smul.u32 16, %s22
        %p341 = scmp.lt.s32.totalorder %s340, 31
        %s342 = scalar_select %p341, %s340, 31
        %s343 = smul.addr %s342, 8
        %s344 = scalar_lea.vmem %s0, %s343
        %s345 = smul.u32 16, %s22
        %p346 = scmp.lt.s32.totalorder %s23, 1
        %s347 = scalar_select %p346, %s23, 1
        %s348 = scalar_lea.vmem %s3, %s347
        %s349 = smul.u32 16, %s22
        %v350 = vld [vmem:[%s344] sm:$0xff]
        %v351 = vld [vmem:[%s344 + $0x8] sm:$0xff]
        %v352 = vld [vmem:[%s344 + $0x10] sm:$0xff]
        %v353 = vld [vmem:[%s344 + $0x18] sm:$0xff]
        %v354 = vld [vmem:[%s344 + $0x20] sm:$0xff]
        %v355 = vld [vmem:[%s344 + $0x28] sm:$0xff]
        %v356 = vld [vmem:[%s344 + $0x30] sm:$0xff]
        %v357 = vld [vmem:[%s344 + $0x38] sm:$0xff]
        %v358 = vld [vmem:[%s344 + $0x40] sm:$0xff]
        %v359 = vld [vmem:[%s344 + $0x48] sm:$0xff]
        %v360 = vld [vmem:[%s344 + $0x50] sm:$0xff]
        %v361 = vld [vmem:[%s344 + $0x58] sm:$0xff]
        %v362 = vld [vmem:[%s344 + $0x60] sm:$0xff]
        %v363 = vld [vmem:[%s344 + $0x68] sm:$0xff]
        %v364 = vld [vmem:[%s344 + $0x70] sm:$0xff]
        %v365 = vld [vmem:[%s344 + $0x78] sm:$0xff]
        %v366 = vld [vmem:[%s1] sm:$0x1]
        %v367 = vmul.f32 %v350, %v350
        %v368 = vmul.f32 %v351, %v351
        %v369 = vmul.f32 %v352, %v352
        %v370 = vmul.f32 %v353, %v353
        %v371 = vmul.f32 %v354, %v354
        %v372 = vmul.f32 %v355, %v355
        %v373 = vmul.f32 %v356, %v356
        %v374 = vmul.f32 %v357, %v357
        %v375 = vmul.f32 %v358, %v358
        %v376 = vmul.f32 %v359, %v359
        %v377 = vmul.f32 %v360, %v360
        %v378 = vmul.f32 %v361, %v361
        %v379 = vmul.f32 %v362, %v362
        %v380 = vmul.f32 %v363, %v363
        %v381 = vmul.f32 %v364, %v364
        %v382 = vmul.f32 %v365, %v365
        %383 = vadd.xlane.f32.xlu0 %v367
        %v384 = vpop.xlane.xlu0 %383
        %385 = vadd.xlane.f32.xlu0 %v368
        %v386 = vpop.xlane.xlu0 %385
        %387 = vadd.xlane.f32.xlu0 %v369
        %v388 = vpop.xlane.xlu0 %387
        %389 = vadd.xlane.f32.xlu0 %v370
        %v390 = vpop.xlane.xlu0 %389
        %391 = vadd.xlane.f32.xlu0 %v371
        %v392 = vpop.xlane.xlu0 %391
        %393 = vadd.xlane.f32.xlu0 %v372
        %v394 = vpop.xlane.xlu0 %393
        %395 = vadd.xlane.f32.xlu0 %v373
        %v396 = vpop.xlane.xlu0 %395
        %397 = vadd.xlane.f32.xlu0 %v374
        %v398 = vpop.xlane.xlu0 %397
        %399 = vadd.xlane.f32.xlu0 %v375
        %v400 = vpop.xlane.xlu0 %399
        %401 = vadd.xlane.f32.xlu0 %v376
        %v402 = vpop.xlane.xlu0 %401
        %403 = vadd.xlane.f32.xlu0 %v377
        %v404 = vpop.xlane.xlu0 %403
        %405 = vadd.xlane.f32.xlu0 %v378
        %v406 = vpop.xlane.xlu0 %405
        %407 = vadd.xlane.f32.xlu0 %v379
        %v408 = vpop.xlane.xlu0 %407
        %409 = vadd.xlane.f32.xlu0 %v380
        %v410 = vpop.xlane.xlu0 %409
        %411 = vadd.xlane.f32.xlu0 %v381
        %v412 = vpop.xlane.xlu0 %411
        %413 = vadd.xlane.f32.xlu0 %v382
        %v414 = vpop.xlane.xlu0 %413
        %v415 = vrcp.pop 128.0
        %v416 = vmul.f32 128.0, %v415
        %v417 = vsub.f32 1.0, %v416
        %v418 = vmul.f32 %v415, %v417
        %v419 = vadd.f32 %v415, %v418
        %vm420 = vweird.f32 %v415
        %v421 = vsel %vm420, %v415, %v419
        %v422 = vmul.f32 %v384, %v421
        %v423 = vmul.f32 %v386, %v421
        %v424 = vmul.f32 %v388, %v421
        %v425 = vmul.f32 %v390, %v421
        %v426 = vmul.f32 %v392, %v421
        %v427 = vmul.f32 %v394, %v421
        %v428 = vmul.f32 %v396, %v421
        %v429 = vmul.f32 %v398, %v421
        %v430 = vmul.f32 %v400, %v421
        %v431 = vmul.f32 %v402, %v421
        %v432 = vmul.f32 %v404, %v421
        %v433 = vmul.f32 %v406, %v421
        %v434 = vmul.f32 %v408, %v421
        %v435 = vmul.f32 %v410, %v421
        %v436 = vmul.f32 %v412, %v421
        %v437 = vmul.f32 %v414, %v421
        %v438 = vrsqrt.pop %v422
        %v439 = vmul.f32 %v438, %v422
        %v440 = vmul.f32 %v439, %v438
        %v441 = vmul.f32 0.5, %v440
        %v442 = vsub.f32 1.5, %v441
        %v443 = vmul.f32 %v438, %v442
        %v444 = vmul.f32 %v422, %v443
        %vm445 = vcmp.eq.f32.partialorder %v422, inf
        %v446 = vsel %vm445, %v422, %v444
        %vm447 = vcmp.eq.f32.partialorder %v422, 0.0
        %v448 = vand.u32 %v422, 2147483648
        %v449 = vsel %vm447, %v448, %v446
        %v450 = vrsqrt.pop %v423
        %v451 = vmul.f32 %v450, %v423
        %v452 = vmul.f32 %v451, %v450
        %v453 = vmul.f32 0.5, %v452
        %v454 = vsub.f32 1.5, %v453
        %v455 = vmul.f32 %v450, %v454
        %v456 = vmul.f32 %v423, %v455
        %vm457 = vcmp.eq.f32.partialorder %v423, inf
        %v458 = vsel %vm457, %v423, %v456
        %vm459 = vcmp.eq.f32.partialorder %v423, 0.0
        %v460 = vand.u32 %v423, 2147483648
        %v461 = vsel %vm459, %v460, %v458
        %v462 = vrsqrt.pop %v424
        %v463 = vmul.f32 %v462, %v424
        %v464 = vmul.f32 %v463, %v462
        %v465 = vmul.f32 0.5, %v464
        %v466 = vsub.f32 1.5, %v465
        %v467 = vmul.f32 %v462, %v466
        %v468 = vmul.f32 %v424, %v467
        %vm469 = vcmp.eq.f32.partialorder %v424, inf
        %v470 = vsel %vm469, %v424, %v468
        %vm471 = vcmp.eq.f32.partialorder %v424, 0.0
        %v472 = vand.u32 %v424, 2147483648
        %v473 = vsel %vm471, %v472, %v470
        %v474 = vrsqrt.pop %v425
        %v475 = vmul.f32 %v474, %v425
        %v476 = vmul.f32 %v475, %v474
        %v477 = vmul.f32 0.5, %v476
        %v478 = vsub.f32 1.5, %v477
        %v479 = vmul.f32 %v474, %v478
        %v480 = vmul.f32 %v425, %v479
        %vm481 = vcmp.eq.f32.partialorder %v425, inf
        %v482 = vsel %vm481, %v425, %v480
        %vm483 = vcmp.eq.f32.partialorder %v425, 0.0
        %v484 = vand.u32 %v425, 2147483648
        %v485 = vsel %vm483, %v484, %v482
        %v486 = vrsqrt.pop %v426
        %v487 = vmul.f32 %v486, %v426
        %v488 = vmul.f32 %v487, %v486
        %v489 = vmul.f32 0.5, %v488
        %v490 = vsub.f32 1.5, %v489
        %v491 = vmul.f32 %v486, %v490
        %v492 = vmul.f32 %v426, %v491
        %vm493 = vcmp.eq.f32.partialorder %v426, inf
        %v494 = vsel %vm493, %v426, %v492
        %vm495 = vcmp.eq.f32.partialorder %v426, 0.0
        %v496 = vand.u32 %v426, 2147483648
        %v497 = vsel %vm495, %v496, %v494
        %v498 = vrsqrt.pop %v427
        %v499 = vmul.f32 %v498, %v427
        %v500 = vmul.f32 %v499, %v498
        %v501 = vmul.f32 0.5, %v500
        %v502 = vsub.f32 1.5, %v501
        %v503 = vmul.f32 %v498, %v502
        %v504 = vmul.f32 %v427, %v503
        %vm505 = vcmp.eq.f32.partialorder %v427, inf
        %v506 = vsel %vm505, %v427, %v504
        %vm507 = vcmp.eq.f32.partialorder %v427, 0.0
        %v508 = vand.u32 %v427, 2147483648
        %v509 = vsel %vm507, %v508, %v506
        %v510 = vrsqrt.pop %v428
        %v511 = vmul.f32 %v510, %v428
        %v512 = vmul.f32 %v511, %v510
        %v513 = vmul.f32 0.5, %v512
        %v514 = vsub.f32 1.5, %v513
        %v515 = vmul.f32 %v510, %v514
        %v516 = vmul.f32 %v428, %v515
        %vm517 = vcmp.eq.f32.partialorder %v428, inf
        %v518 = vsel %vm517, %v428, %v516
        %vm519 = vcmp.eq.f32.partialorder %v428, 0.0
        %v520 = vand.u32 %v428, 2147483648
        %v521 = vsel %vm519, %v520, %v518
        %v522 = vrsqrt.pop %v429
        %v523 = vmul.f32 %v522, %v429
        %v524 = vmul.f32 %v523, %v522
        %v525 = vmul.f32 0.5, %v524
        %v526 = vsub.f32 1.5, %v525
        %v527 = vmul.f32 %v522, %v526
        %v528 = vmul.f32 %v429, %v527
        %vm529 = vcmp.eq.f32.partialorder %v429, inf
        %v530 = vsel %vm529, %v429, %v528
        %vm531 = vcmp.eq.f32.partialorder %v429, 0.0
        %v532 = vand.u32 %v429, 2147483648
        %v533 = vsel %vm531, %v532, %v530
        %v534 = vrsqrt.pop %v430
        %v535 = vmul.f32 %v534, %v430
        %v536 = vmul.f32 %v535, %v534
        %v537 = vmul.f32 0.5, %v536
        %v538 = vsub.f32 1.5, %v537
        %v539 = vmul.f32 %v534, %v538
        %v540 = vmul.f32 %v430, %v539
        %vm541 = vcmp.eq.f32.partialorder %v430, inf
        %v542 = vsel %vm541, %v430, %v540
        %vm543 = vcmp.eq.f32.partialorder %v430, 0.0
        %v544 = vand.u32 %v430, 2147483648
        %v545 = vsel %vm543, %v544, %v542
        %v546 = vrsqrt.pop %v431
        %v547 = vmul.f32 %v546, %v431
        %v548 = vmul.f32 %v547, %v546
        %v549 = vmul.f32 0.5, %v548
        %v550 = vsub.f32 1.5, %v549
        %v551 = vmul.f32 %v546, %v550
        %v552 = vmul.f32 %v431, %v551
        %vm553 = vcmp.eq.f32.partialorder %v431, inf
        %v554 = vsel %vm553, %v431, %v552
        %vm555 = vcmp.eq.f32.partialorder %v431, 0.0
        %v556 = vand.u32 %v431, 2147483648
        %v557 = vsel %vm555, %v556, %v554
        %v558 = vrsqrt.pop %v432
        %v559 = vmul.f32 %v558, %v432
        %v560 = vmul.f32 %v559, %v558
        %v561 = vmul.f32 0.5, %v560
        %v562 = vsub.f32 1.5, %v561
        %v563 = vmul.f32 %v558, %v562
        %v564 = vmul.f32 %v432, %v563
        %vm565 = vcmp.eq.f32.partialorder %v432, inf
        %v566 = vsel %vm565, %v432, %v564
        %vm567 = vcmp.eq.f32.partialorder %v432, 0.0
        %v568 = vand.u32 %v432, 2147483648
        %v569 = vsel %vm567, %v568, %v566
        %v570 = vrsqrt.pop %v433
        %v571 = vmul.f32 %v570, %v433
        %v572 = vmul.f32 %v571, %v570
        %v573 = vmul.f32 0.5, %v572
        %v574 = vsub.f32 1.5, %v573
        %v575 = vmul.f32 %v570, %v574
        %v576 = vmul.f32 %v433, %v575
        %vm577 = vcmp.eq.f32.partialorder %v433, inf
        %v578 = vsel %vm577, %v433, %v576
        %vm579 = vcmp.eq.f32.partialorder %v433, 0.0
        %v580 = vand.u32 %v433, 2147483648
        %v581 = vsel %vm579, %v580, %v578
        %v582 = vrsqrt.pop %v434
        %v583 = vmul.f32 %v582, %v434
        %v584 = vmul.f32 %v583, %v582
        %v585 = vmul.f32 0.5, %v584
        %v586 = vsub.f32 1.5, %v585
        %v587 = vmul.f32 %v582, %v586
        %v588 = vmul.f32 %v434, %v587
        %vm589 = vcmp.eq.f32.partialorder %v434, inf
        %v590 = vsel %vm589, %v434, %v588
        %vm591 = vcmp.eq.f32.partialorder %v434, 0.0
        %v592 = vand.u32 %v434, 2147483648
        %v593 = vsel %vm591, %v592, %v590
        %v594 = vrsqrt.pop %v435
        %v595 = vmul.f32 %v594, %v435
        %v596 = vmul.f32 %v595, %v594
        %v597 = vmul.f32 0.5, %v596
        %v598 = vsub.f32 1.5, %v597
        %v599 = vmul.f32 %v594, %v598
        %v600 = vmul.f32 %v435, %v599
        %vm601 = vcmp.eq.f32.partialorder %v435, inf
        %v602 = vsel %vm601, %v435, %v600
        %vm603 = vcmp.eq.f32.partialorder %v435, 0.0
        %v604 = vand.u32 %v435, 2147483648
        %v605 = vsel %vm603, %v604, %v602
        %v606 = vrsqrt.pop %v436
        %v607 = vmul.f32 %v606, %v436
        %v608 = vmul.f32 %v607, %v606
        %v609 = vmul.f32 0.5, %v608
        %v610 = vsub.f32 1.5, %v609
        %v611 = vmul.f32 %v606, %v610
        %v612 = vmul.f32 %v436, %v611
        %vm613 = vcmp.eq.f32.partialorder %v436, inf
        %v614 = vsel %vm613, %v436, %v612
        %vm615 = vcmp.eq.f32.partialorder %v436, 0.0
        %v616 = vand.u32 %v436, 2147483648
        %v617 = vsel %vm615, %v616, %v614
        %v618 = vrsqrt.pop %v437
        %v619 = vmul.f32 %v618, %v437
        %v620 = vmul.f32 %v619, %v618
        %v621 = vmul.f32 0.5, %v620
        %v622 = vsub.f32 1.5, %v621
        %v623 = vmul.f32 %v618, %v622
        %v624 = vmul.f32 %v437, %v623
        %vm625 = vcmp.eq.f32.partialorder %v437, inf
        %v626 = vsel %vm625, %v437, %v624
        %vm627 = vcmp.eq.f32.partialorder %v437, 0.0
        %v628 = vand.u32 %v437, 2147483648
        %v629 = vsel %vm627, %v628, %v626
        %v630 = vadd.f32 %v449, 0.01
        %v631 = vadd.f32 %v461, 0.01
        %v632 = vadd.f32 %v473, 0.01
        %v633 = vadd.f32 %v485, 0.01
        %v634 = vadd.f32 %v497, 0.01
        %v635 = vadd.f32 %v509, 0.01
        %v636 = vadd.f32 %v521, 0.01
        %v637 = vadd.f32 %v533, 0.01
        %v638 = vadd.f32 %v545, 0.01
        %v639 = vadd.f32 %v557, 0.01
        %v640 = vadd.f32 %v569, 0.01
        %v641 = vadd.f32 %v581, 0.01
        %v642 = vadd.f32 %v593, 0.01
        %v643 = vadd.f32 %v605, 0.01
        %v644 = vadd.f32 %v617, 0.01
        %v645 = vadd.f32 %v629, 0.01
        %v646 = vrcp.pop %v630
        %v647 = vrcp.pop %v631
        %v648 = vrcp.pop %v632
        %v649 = vrcp.pop %v633
        %v650 = vrcp.pop %v634
        %v651 = vrcp.pop %v635
        %v652 = vrcp.pop %v636
        %v653 = vrcp.pop %v637
        %v654 = vrcp.pop %v638
        %v655 = vrcp.pop %v639
        %v656 = vrcp.pop %v640
        %v657 = vrcp.pop %v641
        %v658 = vrcp.pop %v642
        %v659 = vrcp.pop %v643
        %v660 = vrcp.pop %v644
        %v661 = vrcp.pop %v645
        %v662 = vmul.f32 %v350, %v646
        %v663 = vmul.f32 %v351, %v647
        %v664 = vmul.f32 %v352, %v648
        %v665 = vmul.f32 %v353, %v649
        %v666 = vmul.f32 %v354, %v650
        %v667 = vmul.f32 %v355, %v651
        %v668 = vmul.f32 %v356, %v652
        %v669 = vmul.f32 %v357, %v653
        %v670 = vmul.f32 %v358, %v654
        %v671 = vmul.f32 %v359, %v655
        %v672 = vmul.f32 %v360, %v656
        %v673 = vmul.f32 %v361, %v657
        %v674 = vmul.f32 %v362, %v658
        %v675 = vmul.f32 %v363, %v659
        %v676 = vmul.f32 %v364, %v660
        %v677 = vmul.f32 %v365, %v661
        %v679 = vperm.slane %v366, 0
        %v681 = vmul.f32 %v662, %v679
        %v682 = vmul.f32 %v663, %v679
        %v683 = vmul.f32 %v664, %v679
        %v684 = vmul.f32 %v665, %v679
        %v685 = vmul.f32 %v666, %v679
        %v686 = vmul.f32 %v667, %v679
        %v687 = vmul.f32 %v668, %v679
        %v688 = vmul.f32 %v669, %v679
        %v689 = vmul.f32 %v670, %v679
        %v690 = vmul.f32 %v671, %v679
        %v691 = vmul.f32 %v672, %v679
        %v692 = vmul.f32 %v673, %v679
        %v693 = vmul.f32 %v674, %v679
        %v694 = vmul.f32 %v675, %v679
        %v695 = vmul.f32 %v676, %v679
        %v696 = vmul.f32 %v677, %v679
        %v697 = vpack.c.bf16 %v682, %v681
        %v698 = vpack.c.bf16 %v684, %v683
        %v699 = vpack.c.bf16 %v686, %v685
        %v700 = vpack.c.bf16 %v688, %v687
        %v701 = vpack.c.bf16 %v690, %v689
        %v702 = vpack.c.bf16 %v692, %v691
        %v703 = vpack.c.bf16 %v694, %v693
        %v704 = vpack.c.bf16 %v696, %v695
        %v705 = vld [vmem:[%s309] sm:$0xf]
        %v706 = vld [vmem:[%s309 + $0x4] sm:$0xf]
        %v707 = vld [vmem:[%s309 + $0x8] sm:$0xf]
        %v708 = vld [vmem:[%s309 + $0xc] sm:$0xf]
        %v709 = vld [vmem:[%s309 + $0x10] sm:$0xf]
        %v710 = vld [vmem:[%s309 + $0x14] sm:$0xf]
        %v711 = vld [vmem:[%s309 + $0x18] sm:$0xf]
        %v712 = vld [vmem:[%s309 + $0x1c] sm:$0xf]
        %v713 = vld [vmem:[%s309 + $0x20] sm:$0xf]
        %v714 = vld [vmem:[%s309 + $0x24] sm:$0xf]
        %v715 = vld [vmem:[%s309 + $0x28] sm:$0xf]
        %v716 = vld [vmem:[%s309 + $0x2c] sm:$0xf]
        %v717 = vld [vmem:[%s309 + $0x30] sm:$0xf]
        %v718 = vld [vmem:[%s309 + $0x34] sm:$0xf]
        %v719 = vld [vmem:[%s309 + $0x38] sm:$0xf]
        %v720 = vld [vmem:[%s309 + $0x3c] sm:$0xf]
        %v721 = vld [vmem:[%s348] sm:$0x1]
        %v723 = vperm.slane %v721, 0
        %v741 = vunpack.c.l.b16 %v705
        %v742 = vunpack.c.l.b16 %v706
        %v743 = vunpack.c.l.b16 %v707
        %v744 = vunpack.c.l.b16 %v708
        %v745 = vunpack.c.l.b16 %v709
        %v746 = vunpack.c.l.b16 %v710
        %v747 = vunpack.c.l.b16 %v711
        %v748 = vunpack.c.l.b16 %v712
        %v749 = vunpack.c.l.b16 %v713
        %v750 = vunpack.c.l.b16 %v714
        %v751 = vunpack.c.l.b16 %v715
        %v752 = vunpack.c.l.b16 %v716
        %v753 = vunpack.c.l.b16 %v717
        %v754 = vunpack.c.l.b16 %v718
        %v755 = vunpack.c.l.b16 %v719
        %v756 = vunpack.c.l.b16 %v720
        %v757 = vpack.c.b16 %v742, %v741
        %v758 = vpack.c.b16 %v744, %v743
        %v759 = vpack.c.b16 %v746, %v745
        %v760 = vpack.c.b16 %v748, %v747
        %v761 = vpack.c.b16 %v750, %v749
        %v762 = vpack.c.b16 %v752, %v751
        %v763 = vpack.c.b16 %v754, %v753
        %v764 = vpack.c.b16 %v756, %v755
        %773 = vmatpush.bf16.msra.mxu0 %v764
        %774 = vmatpush.bf16.msra.mxu0 %v763
        %775 = vmatpush.bf16.msra.mxu0 %v762
        %776 = vmatpush.bf16.msra.mxu0 %v761
        %777 = vmatpush.bf16.msra.mxu0 %v760
        %778 = vmatpush.bf16.msra.mxu0 %v759
        %779 = vmatpush.bf16.msra.mxu0 %v758
        %780 = vmatpush.bf16.msra.mxu0 %v757
        %781 = vmatmul.bf16.gmra.mxu0 %v697
        %v782 = vpop.f32.mrf.mxu0
        %v783 = vadd.f32 %v723, %v782
        %v784 = vpop.f32.mrf.mxu0
        %v785 = vadd.f32 %v723, %v784
        %786 = vmatmul.bf16.gmra.mxu0 %v698
        %v787 = vpop.f32.mrf.mxu0
        %v788 = vadd.f32 %v723, %v787
        %v789 = vpop.f32.mrf.mxu0
        %v790 = vadd.f32 %v723, %v789
        %791 = vmatmul.bf16.gmra.mxu0 %v699
        %v792 = vpop.f32.mrf.mxu0
        %v793 = vadd.f32 %v723, %v792
        %v794 = vpop.f32.mrf.mxu0
        %v795 = vadd.f32 %v723, %v794
        %796 = vmatmul.bf16.gmra.mxu0 %v700
        %v797 = vpop.f32.mrf.mxu0
        %v798 = vadd.f32 %v723, %v797
        %v799 = vpop.f32.mrf.mxu0
        %v800 = vadd.f32 %v723, %v799
        %801 = vmatmul.bf16.gmra.mxu0 %v701
        %v802 = vpop.f32.mrf.mxu0
        %v803 = vadd.f32 %v723, %v802
        %v804 = vpop.f32.mrf.mxu0
        %v805 = vadd.f32 %v723, %v804
        %806 = vmatmul.bf16.gmra.mxu0 %v702
        %v807 = vpop.f32.mrf.mxu0
        %v808 = vadd.f32 %v723, %v807
        %v809 = vpop.f32.mrf.mxu0
        %v810 = vadd.f32 %v723, %v809
        %811 = vmatmul.bf16.gmra.mxu0 %v703
        %v812 = vpop.f32.mrf.mxu0
        %v813 = vadd.f32 %v723, %v812
        %v814 = vpop.f32.mrf.mxu0
        %v815 = vadd.f32 %v723, %v814
        %816 = vmatmul.bf16.gmra.mxu0 %v704
        %v817 = vpop.f32.mrf.mxu0
        %v818 = vadd.f32 %v723, %v817
        %v819 = vpop.f32.mrf.mxu0
        %v820 = vadd.f32 %v723, %v819
        %821 = vdwg.mxu0
        %822 = vst [vmem:[%s339] sm:$0xff] %v783
        %823 = vst [vmem:[%s339 + $0x8] sm:$0xff] %v785
        %824 = vst [vmem:[%s339 + $0x10] sm:$0xff] %v788
        %825 = vst [vmem:[%s339 + $0x18] sm:$0xff] %v790
        %826 = vst [vmem:[%s339 + $0x20] sm:$0xff] %v793
        %827 = vst [vmem:[%s339 + $0x28] sm:$0xff] %v795
        %828 = vst [vmem:[%s339 + $0x30] sm:$0xff] %v798
        %829 = vst [vmem:[%s339 + $0x38] sm:$0xff] %v800
        %830 = vst [vmem:[%s339 + $0x40] sm:$0xff] %v803
        %831 = vst [vmem:[%s339 + $0x48] sm:$0xff] %v805
        %832 = vst [vmem:[%s339 + $0x50] sm:$0xff] %v808
        %833 = vst [vmem:[%s339 + $0x58] sm:$0xff] %v810
        %834 = vst [vmem:[%s339 + $0x60] sm:$0xff] %v813
        %835 = vst [vmem:[%s339 + $0x68] sm:$0xff] %v815
        %836 = vst [vmem:[%s339 + $0x70] sm:$0xff] %v818
        %837 = vst [vmem:[%s339 + $0x78] sm:$0xff] %v820
        %s838 = sand.u32 %s139, 1
        %s839 = scalar_lea.sflag [#allocation4], %s838
        %s840 = sand.u32 %s139, 1
        %s841 = smul.addr %s840, 128
        %s842 = scalar_lea.vmem [#allocation3], %s841
        // Predicated region
        $region78: #{llama2_layer_forward.5} parent=72 // pred_check
          %p843 = pneg %p149
        $region79: #{llama2_layer_forward.5} parent=72 // pred_check_branch
          %845 = sbr.rel (%p843) target = $region81
        $region80: #{llama2_layer_forward.5} parent=72 // pred_region
          %s846 = smul.u32 16, %s22
          %848 = vsyncadd %s839, 0
          %s849 = smul.addr %s846, 2
          %s850 = sadd.s32 %s23, %s849
          %s851 = smul.addr %s850, 8
          %s852 = scalar_lea.hbm %s4, %s851
          %s853 = sshll.u32 %s842, 4
          %s854 = int_to_ptr.vmem [resolvable:$true] %s853
          %s855 = sshll.u32 %s852, 4
          %s856 = int_to_ptr.hbm [resolvable:$true] %s855
          %861 = dma.vmem_to_hbm [thread:$0]  %s854, 2048, %s856, %s839, 128, 256, 8
        $region81: #{llama2_layer_forward.5} parent=72 // pred_fallthru
          _
      $region73: #{llama2_layer_forward.5} parent=5 // pred_fallthru
        _
      %p862 = scmp.le.s32.totalorder 2, %s13
      // Predicated region
      $region82: #{llama2_layer_forward.5} parent=5 // pred_check
        %p863 = pneg %p862
      $region83: #{llama2_layer_forward.5} parent=5 // pred_check_branch
        %865 = sbr.rel (%p863) target = $region85
      $region84: #{llama2_layer_forward.5} parent=5 // pred_region
        %s866 = ssub.s32 %s13, 2
        // Predicated region
        $region86: #{llama2_layer_forward.5} parent=84 // pred_check
          %p867 = pneg %p155
        $region87: #{llama2_layer_forward.5} parent=84 // pred_check_branch
          %869 = sbr.rel (%p867) target = $region89
        $region88: #{llama2_layer_forward.5} parent=84 // pred_region
          %s870 = sand.u32 %s140, 1
          %s871 = scalar_lea.sflag [#allocation4], %s870
          %s872 = sand.u32 %s140, 1
          %s873 = smul.addr %s872, 128
          %s874 = scalar_lea.vmem [#allocation3], %s873
          %876 = dma.done %s871, 2048
        $region89: #{llama2_layer_forward.5} parent=84 // pred_fallthru
          _
      $region85: #{llama2_layer_forward.5} parent=5 // pred_fallthru
        _
    $region6: #{llama2_layer_forward.5} parent=1 // loop_footer
      %s17 = sadd.s32 1, %s13
    $region7: #{llama2_layer_forward.5} parent=1 // loop_footer_branch
      %12 = sbr.rel target = $region3
    $region8: #{llama2_layer_forward.5} parent=1 // loop_exit
      _
    %877 = vsyncpa [#allocation4], 1
    %s878 = scalar_lea.sflag [#allocation4], 1
    %879 = vsyncpa %s878, 1

// kernel: llama2_layer_forward.3
$region0: #{llama2_layer_forward.3}
  #allocation0 [shape = 'u32[]', space=smem, size = 0x4, offset = 0x4, fixed_abs, tag = 'smem constant byte address 0x4 - core index']
  #allocation1 [shape = 'u32[72,128]{1,0:T(1,128)}', space=vmem, size = 0x9000, scoped, tag = 'internal scratch']
  %s0 = inlined_call_operand.vmem [shape: f32[2,128,128], index: 0, kind: input, shape index: {}, may-alias: {0,4}]
  %s1 = inlined_call_operand.vmem [shape: f32[1,128], index: 1, kind: input, shape index: {}]
  %s2 = inlined_call_operand.vmem [shape: bf16[128,128], index: 2, kind: input, shape index: {}]
  %s3 = inlined_call_operand.vmem [shape: f32[1,128], index: 3, kind: input, shape index: {}]
  %s4 = inlined_call_operand.vmem [shape: f32[2,128,128], index: 4, kind: output, shape index: {}, may-alias: {0,4}]
  %s5 = sld [smem:[#allocation0]]
  $region49: #{llama2_layer_forward.3} parent=0
    _
  %s7 = ssub.s32 1, %s5
  %s8 = scalar_select 0, %s7, %s5
  loop: start=0, step=1, limit=4
  $region2: #{llama2_layer_forward.3} parent=0 // loop_pre_header
    _
  $region3: #{llama2_layer_forward.3} parent=0 // loop_header
    %s10 = sphi 0, %s14
    %p11 = scmp.ge.s32.totalorder %s10, 4
    %s20 = sphi 0, %s22
    %s23 = sphi 0, %s20
    %s24 = sphi 0, %s23
    %s40 = sphi 0, %s24
    %s44 = sphi 0, %s44
    %s46 = sphi 0, %s44
    %s47 = sphi 0, %s46
    %s61 = sphi 0, %s47
    %s65 = sphi 0, %s65
    %s67 = sphi 0, %s65
    %s68 = sphi 0, %s67
    %s82 = sphi 0, %s68
    %s86 = sphi 0, %s86
    %s88 = sphi 0, %s86
    %s89 = sphi 0, %s88
    %s103 = sphi 0, %s89
    %s109 = sphi 0, %s111
    %s112 = sphi 0, %s109
    %s113 = sphi 0, %s112
    %s129 = sphi 0, %s113
  $region4: #{llama2_layer_forward.3} parent=0 // loop_header_branch
    %13 = sbr.rel (%p11) target = $region8
  $region5: #{llama2_layer_forward.3} parent=0 // loop_body
    %s15 = ssub.s32 %s10, 1
    %s16 = ssub.s32 %s10, 2
    %s17 = sadd.s32 %s10, 1
    %s18 = ssub.s32 %s10, %s17
    %p19 = scmp.eq.s32.totalorder %s18, 0
    %s21 = sadd.s32 %s20, 1
    %s22 = scalar_select %p19, %s20, %s21
    %p25 = pneg %p19
    %p26 = scmp.eq.s32.totalorder %s10, 1
    %p27 = por %p25, %p26
    %p28 = scmp.ne.s32.totalorder %s20, %s23
    %p29 = scmp.eq.s32.totalorder %s10, 0
    %p30 = por %p28, %p29
    %p31 = scmp.ne.s32.totalorder %s20, %s23
    %p32 = scmp.eq.s32.totalorder %s15, 1
    %p33 = por %p31, %p32
    %p34 = scmp.ne.s32.totalorder %s23, %s24
    %p35 = scmp.eq.s32.totalorder %s15, 0
    %p36 = por %p34, %p35
    %p37 = scmp.ne.s32.totalorder %s23, %s24
    %p38 = scmp.eq.s32.totalorder %s16, 1
    %p39 = por %p37, %p38
    %p41 = scmp.ne.s32.totalorder %s24, %s40
    %p42 = scmp.eq.s32.totalorder %s16, 0
    %p43 = por %p41, %p42
    %s45 = sadd.s32 %s44, 1
    %p48 = scmp.eq.s32.totalorder %s10, 1
    %p49 = scmp.ne.s32.totalorder %s44, %s46
    %p50 = scmp.eq.s32.totalorder %s10, 0
    %p51 = por %p49, %p50
    %p52 = scmp.ne.s32.totalorder %s44, %s46
    %p53 = scmp.eq.s32.totalorder %s15, 1
    %p54 = por %p52, %p53
    %p55 = scmp.ne.s32.totalorder %s46, %s47
    %p56 = scmp.eq.s32.totalorder %s15, 0
    %p57 = por %p55, %p56
    %p58 = scmp.ne.s32.totalorder %s46, %s47
    %p59 = scmp.eq.s32.totalorder %s16, 1
    %p60 = por %p58, %p59
    %p62 = scmp.ne.s32.totalorder %s47, %s61
    %p63 = scmp.eq.s32.totalorder %s16, 0
    %p64 = por %p62, %p63
    %s66 = sadd.s32 %s65, 1
    %p69 = scmp.eq.s32.totalorder %s10, 1
    %p70 = scmp.ne.s32.totalorder %s65, %s67
    %p71 = scmp.eq.s32.totalorder %s10, 0
    %p72 = por %p70, %p71
    %p73 = scmp.ne.s32.totalorder %s65, %s67
    %p74 = scmp.eq.s32.totalorder %s15, 1
    %p75 = por %p73, %p74
    %p76 = scmp.ne.s32.totalorder %s67, %s68
    %p77 = scmp.eq.s32.totalorder %s15, 0
    %p78 = por %p76, %p77
    %p79 = scmp.ne.s32.totalorder %s67, %s68
    %p80 = scmp.eq.s32.totalorder %s16, 1
    %p81 = por %p79, %p80
    %p83 = scmp.ne.s32.totalorder %s68, %s82
    %p84 = scmp.eq.s32.totalorder %s16, 0
    %p85 = por %p83, %p84
    %s87 = sadd.s32 %s86, 1
    %p90 = scmp.eq.s32.totalorder %s10, 1
    %p91 = scmp.ne.s32.totalorder %s86, %s88
    %p92 = scmp.eq.s32.totalorder %s10, 0
    %p93 = por %p91, %p92
    %p94 = scmp.ne.s32.totalorder %s86, %s88
    %p95 = scmp.eq.s32.totalorder %s15, 1
    %p96 = por %p94, %p95
    %p97 = scmp.ne.s32.totalorder %s88, %s89
    %p98 = scmp.eq.s32.totalorder %s15, 0
    %p99 = por %p97, %p98
    %p100 = scmp.ne.s32.totalorder %s88, %s89
    %p101 = scmp.eq.s32.totalorder %s16, 1
    %p102 = por %p100, %p101
    %p104 = scmp.ne.s32.totalorder %s89, %s103
    %p105 = scmp.eq.s32.totalorder %s16, 0
    %p106 = por %p104, %p105
    %s107 = ssub.s32 %s10, %s17
    %p108 = scmp.eq.s32.totalorder %s107, 0
    %s110 = sadd.s32 %s109, 1
    %s111 = scalar_select %p108, %s109, %s110
    %p114 = pneg %p108
    %p115 = scmp.eq.s32.totalorder %s10, 1
    %p116 = por %p114, %p115
    %p117 = scmp.ne.s32.totalorder %s109, %s112
    %p118 = scmp.eq.s32.totalorder %s10, 0
    %p119 = por %p117, %p118
    %p120 = scmp.ne.s32.totalorder %s109, %s112
    %p121 = scmp.eq.s32.totalorder %s15, 1
    %p122 = por %p120, %p121
    %p123 = scmp.ne.s32.totalorder %s112, %s113
    %p124 = scmp.eq.s32.totalorder %s15, 0
    %p125 = por %p123, %p124
    %p126 = scmp.ne.s32.totalorder %s112, %s113
    %p127 = scmp.eq.s32.totalorder %s16, 1
    %p128 = por %p126, %p127
    %p130 = scmp.ne.s32.totalorder %s113, %s129
    %p131 = scmp.eq.s32.totalorder %s16, 0
    %p132 = por %p130, %p131
    %p133 = scmp.le.s32.totalorder 1, %s10
    %p134 = scmp.lt.s32.totalorder %s10, 3
    %p135 = pnand %p133, %p134
    %p136 = pneg %p135
    // Predicated region
    $region9: #{llama2_layer_forward.3} parent=5 // pred_check
      _
    $region10: #{llama2_layer_forward.3} parent=5 // pred_check_branch
      %138 = sbr.rel (%p135) target = $region12
    $region11: #{llama2_layer_forward.3} parent=5 // pred_region
      %s139 = ssub.s32 %s10, 1
      // Predicated region
      $region13: #{llama2_layer_forward.3} parent=11 // pred_check
        %p140 = pneg %p57
      $region14: #{llama2_layer_forward.3} parent=11 // pred_check_branch
        %142 = sbr.rel (%p140) target = $region16
      $region15: #{llama2_layer_forward.3} parent=11 // pred_region
        _
      $region16: #{llama2_layer_forward.3} parent=11 // pred_fallthru
        _
      // Predicated region
      $region17: #{llama2_layer_forward.3} parent=11 // pred_check
        %p143 = pneg %p78
      $region18: #{llama2_layer_forward.3} parent=11 // pred_check_branch
        %145 = sbr.rel (%p143) target = $region20
      $region19: #{llama2_layer_forward.3} parent=11 // pred_region
        _
      $region20: #{llama2_layer_forward.3} parent=11 // pred_fallthru
        _
      // Predicated region
      $region21: #{llama2_layer_forward.3} parent=11 // pred_check
        %p146 = pneg %p99
      $region22: #{llama2_layer_forward.3} parent=11 // pred_check_branch
        %148 = sbr.rel (%p146) target = $region24
      $region23: #{llama2_layer_forward.3} parent=11 // pred_region
        _
      $region24: #{llama2_layer_forward.3} parent=11 // pred_fallthru
        _
    $region12: #{llama2_layer_forward.3} parent=5 // pred_fallthru
      _
    %p149 = scmp.lt.s32.totalorder %s10, 2
    // Predicated region
    $region25: #{llama2_layer_forward.3} parent=5 // pred_check
      %p150 = pneg %p149
    $region26: #{llama2_layer_forward.3} parent=5 // pred_check_branch
      %152 = sbr.rel (%p150) target = $region28
    $region27: #{llama2_layer_forward.3} parent=5 // pred_region
      // Predicated region
      $region29: #{llama2_layer_forward.3} parent=27 // pred_check
        %p153 = pneg %p30
      $region30: #{llama2_layer_forward.3} parent=27 // pred_check_branch
        %155 = sbr.rel (%p153) target = $region32
      $region31: #{llama2_layer_forward.3} parent=27 // pred_region
        %p156 = scmp.lt.s32.totalorder %s10, 1
        %s157 = scalar_select %p156, %s10, 1
        %s158 = smul.addr %s157, 16
        %s159 = smul.addr %s158, 8
        %s160 = scalar_lea.vmem %s0, %s159
      $region32: #{llama2_layer_forward.3} parent=27 // pred_fallthru
        _
    $region28: #{llama2_layer_forward.3} parent=5 // pred_fallthru
      _
    %p161 = scmp.le.s32.totalorder 1, %s10
    %p162 = scmp.lt.s32.totalorder %s10, 3
    %p163 = pnand %p161, %p162
    %p164 = pneg %p163
    // Predicated region
    $region33: #{llama2_layer_forward.3} parent=5 // pred_check
      _
    $region34: #{llama2_layer_forward.3} parent=5 // pred_check_branch
      %166 = sbr.rel (%p163) target = $region36
    $region35: #{llama2_layer_forward.3} parent=5 // pred_region
      %s167 = ssub.s32 %s10, 1
      %p168 = scmp.lt.s32.totalorder %s15, 1
      %s169 = scalar_select %p168, %s15, 1
      %s170 = smul.addr %s169, 16
      %s171 = smul.addr %s170, 8
      %s172 = scalar_lea.vmem %s0, %s171
      %p173 = pneg %p36
      %p174 = pneg %p33
      %p175 = pneg %p57
      %p176 = pneg %p54
      %p177 = pneg %p78
      %p178 = pneg %p75
      %p179 = pneg %p99
      %p180 = pneg %p96
      %p181 = pneg %p125
      %p182 = pneg %p122
      %p183 = scmp.lt.s32.totalorder %s15, 1
      %s184 = scalar_select %p183, %s15, 1
      %s185 = smul.addr %s184, 16
      %s186 = smul.addr %s185, 8
      %s187 = scalar_lea.vmem %s4, %s186
      %p188 = scmp.lt.s32.totalorder %s15, 1
      %s189 = scalar_select %p188, %s15, 1
      %s190 = smul.addr %s189, 16
      %s191 = smul.addr %s190, 8
      %s192 = scalar_lea.vmem %s0, %s191
      %p193 = scmp.lt.s32.totalorder %s15, 1
      %s194 = scalar_select %p193, %s15, 1
      %s195 = smul.addr %s194, 16
      %s196 = smul.addr %s195, 8
      %s197 = scalar_lea.vmem %s4, %s196
      %v198 = vld [vmem:[%s192] sm:$0xff]
      %v199 = vld [vmem:[%s192 + $0x8] sm:$0xff]
      %v200 = vld [vmem:[%s192 + $0x10] sm:$0xff]
      %v201 = vld [vmem:[%s192 + $0x18] sm:$0xff]
      %v202 = vld [vmem:[%s192 + $0x20] sm:$0xff]
      %v203 = vld [vmem:[%s192 + $0x28] sm:$0xff]
      %v204 = vld [vmem:[%s192 + $0x30] sm:$0xff]
      %v205 = vld [vmem:[%s192 + $0x38] sm:$0xff]
      %v206 = vld [vmem:[%s192 + $0x40] sm:$0xff]
      %v207 = vld [vmem:[%s192 + $0x48] sm:$0xff]
      %v208 = vld [vmem:[%s192 + $0x50] sm:$0xff]
      %v209 = vld [vmem:[%s192 + $0x58] sm:$0xff]
      %v210 = vld [vmem:[%s192 + $0x60] sm:$0xff]
      %v211 = vld [vmem:[%s192 + $0x68] sm:$0xff]
      %v212 = vld [vmem:[%s192 + $0x70] sm:$0xff]
      %v213 = vld [vmem:[%s192 + $0x78] sm:$0xff]
      %v214 = vld [vmem:[%s1] sm:$0x1]
      %v215 = vmul.f32 %v198, %v198
      %v216 = vmul.f32 %v199, %v199
      %v217 = vmul.f32 %v200, %v200
      %v218 = vmul.f32 %v201, %v201
      %v219 = vmul.f32 %v202, %v202
      %v220 = vmul.f32 %v203, %v203
      %v221 = vmul.f32 %v204, %v204
      %v222 = vmul.f32 %v205, %v205
      %v223 = vmul.f32 %v206, %v206
      %v224 = vmul.f32 %v207, %v207
      %v225 = vmul.f32 %v208, %v208
      %v226 = vmul.f32 %v209, %v209
      %v227 = vmul.f32 %v210, %v210
      %v228 = vmul.f32 %v211, %v211
      %v229 = vmul.f32 %v212, %v212
      %v230 = vmul.f32 %v213, %v213
      %231 = vadd.xlane.f32.xlu0 %v215
      %v232 = vpop.xlane.xlu0 %231
      %233 = vadd.xlane.f32.xlu0 %v216
      %v234 = vpop.xlane.xlu0 %233
      %235 = vadd.xlane.f32.xlu0 %v217
      %v236 = vpop.xlane.xlu0 %235
      %237 = vadd.xlane.f32.xlu0 %v218
      %v238 = vpop.xlane.xlu0 %237
      %239 = vadd.xlane.f32.xlu0 %v219
      %v240 = vpop.xlane.xlu0 %239
      %241 = vadd.xlane.f32.xlu0 %v220
      %v242 = vpop.xlane.xlu0 %241
      %243 = vadd.xlane.f32.xlu0 %v221
      %v244 = vpop.xlane.xlu0 %243
      %245 = vadd.xlane.f32.xlu0 %v222
      %v246 = vpop.xlane.xlu0 %245
      %247 = vadd.xlane.f32.xlu0 %v223
      %v248 = vpop.xlane.xlu0 %247
      %249 = vadd.xlane.f32.xlu0 %v224
      %v250 = vpop.xlane.xlu0 %249
      %251 = vadd.xlane.f32.xlu0 %v225
      %v252 = vpop.xlane.xlu0 %251
      %253 = vadd.xlane.f32.xlu0 %v226
      %v254 = vpop.xlane.xlu0 %253
      %255 = vadd.xlane.f32.xlu0 %v227
      %v256 = vpop.xlane.xlu0 %255
      %257 = vadd.xlane.f32.xlu0 %v228
      %v258 = vpop.xlane.xlu0 %257
      %259 = vadd.xlane.f32.xlu0 %v229
      %v260 = vpop.xlane.xlu0 %259
      %261 = vadd.xlane.f32.xlu0 %v230
      %v262 = vpop.xlane.xlu0 %261
      %v263 = vrcp.pop 128.0
      %v264 = vmul.f32 128.0, %v263
      %v265 = vsub.f32 1.0, %v264
      %v266 = vmul.f32 %v263, %v265
      %v267 = vadd.f32 %v263, %v266
      %vm268 = vweird.f32 %v263
      %v269 = vsel %vm268, %v263, %v267
      %v270 = vmul.f32 %v232, %v269
      %v271 = vmul.f32 %v234, %v269
      %v272 = vmul.f32 %v236, %v269
      %v273 = vmul.f32 %v238, %v269
      %v274 = vmul.f32 %v240, %v269
      %v275 = vmul.f32 %v242, %v269
      %v276 = vmul.f32 %v244, %v269
      %v277 = vmul.f32 %v246, %v269
      %v278 = vmul.f32 %v248, %v269
      %v279 = vmul.f32 %v250, %v269
      %v280 = vmul.f32 %v252, %v269
      %v281 = vmul.f32 %v254, %v269
      %v282 = vmul.f32 %v256, %v269
      %v283 = vmul.f32 %v258, %v269
      %v284 = vmul.f32 %v260, %v269
      %v285 = vmul.f32 %v262, %v269
      %v286 = vrsqrt.pop %v270
      %v287 = vmul.f32 %v286, %v270
      %v288 = vmul.f32 %v287, %v286
      %v289 = vmul.f32 0.5, %v288
      %v290 = vsub.f32 1.5, %v289
      %v291 = vmul.f32 %v286, %v290
      %v292 = vmul.f32 %v270, %v291
      %vm293 = vcmp.eq.f32.partialorder %v270, inf
      %v294 = vsel %vm293, %v270, %v292
      %vm295 = vcmp.eq.f32.partialorder %v270, 0.0
      %v296 = vand.u32 %v270, 2147483648
      %v297 = vsel %vm295, %v296, %v294
      %v298 = vrsqrt.pop %v271
      %v299 = vmul.f32 %v298, %v271
      %v300 = vmul.f32 %v299, %v298
      %v301 = vmul.f32 0.5, %v300
      %v302 = vsub.f32 1.5, %v301
      %v303 = vmul.f32 %v298, %v302
      %v304 = vmul.f32 %v271, %v303
      %vm305 = vcmp.eq.f32.partialorder %v271, inf
      %v306 = vsel %vm305, %v271, %v304
      %vm307 = vcmp.eq.f32.partialorder %v271, 0.0
      %v308 = vand.u32 %v271, 2147483648
      %v309 = vsel %vm307, %v308, %v306
      %v310 = vrsqrt.pop %v272
      %v311 = vmul.f32 %v310, %v272
      %v312 = vmul.f32 %v311, %v310
      %v313 = vmul.f32 0.5, %v312
      %v314 = vsub.f32 1.5, %v313
      %v315 = vmul.f32 %v310, %v314
      %v316 = vmul.f32 %v272, %v315
      %vm317 = vcmp.eq.f32.partialorder %v272, inf
      %v318 = vsel %vm317, %v272, %v316
      %vm319 = vcmp.eq.f32.partialorder %v272, 0.0
      %v320 = vand.u32 %v272, 2147483648
      %v321 = vsel %vm319, %v320, %v318
      %v322 = vrsqrt.pop %v273
      %v323 = vmul.f32 %v322, %v273
      %v324 = vmul.f32 %v323, %v322
      %v325 = vmul.f32 0.5, %v324
      %v326 = vsub.f32 1.5, %v325
      %v327 = vmul.f32 %v322, %v326
      %v328 = vmul.f32 %v273, %v327
      %vm329 = vcmp.eq.f32.partialorder %v273, inf
      %v330 = vsel %vm329, %v273, %v328
      %vm331 = vcmp.eq.f32.partialorder %v273, 0.0
      %v332 = vand.u32 %v273, 2147483648
      %v333 = vsel %vm331, %v332, %v330
      %v334 = vrsqrt.pop %v274
      %v335 = vmul.f32 %v334, %v274
      %v336 = vmul.f32 %v335, %v334
      %v337 = vmul.f32 0.5, %v336
      %v338 = vsub.f32 1.5, %v337
      %v339 = vmul.f32 %v334, %v338
      %v340 = vmul.f32 %v274, %v339
      %vm341 = vcmp.eq.f32.partialorder %v274, inf
      %v342 = vsel %vm341, %v274, %v340
      %vm343 = vcmp.eq.f32.partialorder %v274, 0.0
      %v344 = vand.u32 %v274, 2147483648
      %v345 = vsel %vm343, %v344, %v342
      %v346 = vrsqrt.pop %v275
      %v347 = vmul.f32 %v346, %v275
      %v348 = vmul.f32 %v347, %v346
      %v349 = vmul.f32 0.5, %v348
      %v350 = vsub.f32 1.5, %v349
      %v351 = vmul.f32 %v346, %v350
      %v352 = vmul.f32 %v275, %v351
      %vm353 = vcmp.eq.f32.partialorder %v275, inf
      %v354 = vsel %vm353, %v275, %v352
      %vm355 = vcmp.eq.f32.partialorder %v275, 0.0
      %v356 = vand.u32 %v275, 2147483648
      %v357 = vsel %vm355, %v356, %v354
      %v358 = vrsqrt.pop %v276
      %v359 = vmul.f32 %v358, %v276
      %v360 = vmul.f32 %v359, %v358
      %v361 = vmul.f32 0.5, %v360
      %v362 = vsub.f32 1.5, %v361
      %v363 = vmul.f32 %v358, %v362
      %v364 = vmul.f32 %v276, %v363
      %vm365 = vcmp.eq.f32.partialorder %v276, inf
      %v366 = vsel %vm365, %v276, %v364
      %vm367 = vcmp.eq.f32.partialorder %v276, 0.0
      %v368 = vand.u32 %v276, 2147483648
      %v369 = vsel %vm367, %v368, %v366
      %v370 = vrsqrt.pop %v277
      %v371 = vmul.f32 %v370, %v277
      %v372 = vmul.f32 %v371, %v370
      %v373 = vmul.f32 0.5, %v372
      %v374 = vsub.f32 1.5, %v373
      %v375 = vmul.f32 %v370, %v374
      %v376 = vmul.f32 %v277, %v375
      %vm377 = vcmp.eq.f32.partialorder %v277, inf
      %v378 = vsel %vm377, %v277, %v376
      %vm379 = vcmp.eq.f32.partialorder %v277, 0.0
      %v380 = vand.u32 %v277, 2147483648
      %v381 = vsel %vm379, %v380, %v378
      %v382 = vrsqrt.pop %v278
      %v383 = vmul.f32 %v382, %v278
      %v384 = vmul.f32 %v383, %v382
      %v385 = vmul.f32 0.5, %v384
      %v386 = vsub.f32 1.5, %v385
      %v387 = vmul.f32 %v382, %v386
      %v388 = vmul.f32 %v278, %v387
      %vm389 = vcmp.eq.f32.partialorder %v278, inf
      %v390 = vsel %vm389, %v278, %v388
      %vm391 = vcmp.eq.f32.partialorder %v278, 0.0
      %v392 = vand.u32 %v278, 2147483648
      %v393 = vsel %vm391, %v392, %v390
      %v394 = vrsqrt.pop %v279
      %v395 = vmul.f32 %v394, %v279
      %v396 = vmul.f32 %v395, %v394
      %v397 = vmul.f32 0.5, %v396
      %v398 = vsub.f32 1.5, %v397
      %v399 = vmul.f32 %v394, %v398
      %v400 = vmul.f32 %v279, %v399
      %vm401 = vcmp.eq.f32.partialorder %v279, inf
      %v402 = vsel %vm401, %v279, %v400
      %vm403 = vcmp.eq.f32.partialorder %v279, 0.0
      %v404 = vand.u32 %v279, 2147483648
      %v405 = vsel %vm403, %v404, %v402
      %v406 = vrsqrt.pop %v280
      %v407 = vmul.f32 %v406, %v280
      %v408 = vmul.f32 %v407, %v406
      %v409 = vmul.f32 0.5, %v408
      %v410 = vsub.f32 1.5, %v409
      %v411 = vmul.f32 %v406, %v410
      %v412 = vmul.f32 %v280, %v411
      %vm413 = vcmp.eq.f32.partialorder %v280, inf
      %v414 = vsel %vm413, %v280, %v412
      %vm415 = vcmp.eq.f32.partialorder %v280, 0.0
      %v416 = vand.u32 %v280, 2147483648
      %v417 = vsel %vm415, %v416, %v414
      %v418 = vrsqrt.pop %v281
      %v419 = vmul.f32 %v418, %v281
      %v420 = vmul.f32 %v419, %v418
      %v421 = vmul.f32 0.5, %v420
      %v422 = vsub.f32 1.5, %v421
      %v423 = vmul.f32 %v418, %v422
      %v424 = vmul.f32 %v281, %v423
      %vm425 = vcmp.eq.f32.partialorder %v281, inf
      %v426 = vsel %vm425, %v281, %v424
      %vm427 = vcmp.eq.f32.partialorder %v281, 0.0
      %v428 = vand.u32 %v281, 2147483648
      %v429 = vsel %vm427, %v428, %v426
      %v430 = vrsqrt.pop %v282
      %v431 = vmul.f32 %v430, %v282
      %v432 = vmul.f32 %v431, %v430
      %v433 = vmul.f32 0.5, %v432
      %v434 = vsub.f32 1.5, %v433
      %v435 = vmul.f32 %v430, %v434
      %v436 = vmul.f32 %v282, %v435
      %vm437 = vcmp.eq.f32.partialorder %v282, inf
      %v438 = vsel %vm437, %v282, %v436
      %vm439 = vcmp.eq.f32.partialorder %v282, 0.0
      %v440 = vand.u32 %v282, 2147483648
      %v441 = vsel %vm439, %v440, %v438
      %v442 = vrsqrt.pop %v283
      %v443 = vmul.f32 %v442, %v283
      %v444 = vmul.f32 %v443, %v442
      %v445 = vmul.f32 0.5, %v444
      %v446 = vsub.f32 1.5, %v445
      %v447 = vmul.f32 %v442, %v446
      %v448 = vmul.f32 %v283, %v447
      %vm449 = vcmp.eq.f32.partialorder %v283, inf
      %v450 = vsel %vm449, %v283, %v448
      %vm451 = vcmp.eq.f32.partialorder %v283, 0.0
      %v452 = vand.u32 %v283, 2147483648
      %v453 = vsel %vm451, %v452, %v450
      %v454 = vrsqrt.pop %v284
      %v455 = vmul.f32 %v454, %v284
      %v456 = vmul.f32 %v455, %v454
      %v457 = vmul.f32 0.5, %v456
      %v458 = vsub.f32 1.5, %v457
      %v459 = vmul.f32 %v454, %v458
      %v460 = vmul.f32 %v284, %v459
      %vm461 = vcmp.eq.f32.partialorder %v284, inf
      %v462 = vsel %vm461, %v284, %v460
      %vm463 = vcmp.eq.f32.partialorder %v284, 0.0
      %v464 = vand.u32 %v284, 2147483648
      %v465 = vsel %vm463, %v464, %v462
      %v466 = vrsqrt.pop %v285
      %v467 = vmul.f32 %v466, %v285
      %v468 = vmul.f32 %v467, %v466
      %v469 = vmul.f32 0.5, %v468
      %v470 = vsub.f32 1.5, %v469
      %v471 = vmul.f32 %v466, %v470
      %v472 = vmul.f32 %v285, %v471
      %vm473 = vcmp.eq.f32.partialorder %v285, inf
      %v474 = vsel %vm473, %v285, %v472
      %vm475 = vcmp.eq.f32.partialorder %v285, 0.0
      %v476 = vand.u32 %v285, 2147483648
      %v477 = vsel %vm475, %v476, %v474
      %v478 = vadd.f32 %v297, 0.01
      %v479 = vadd.f32 %v309, 0.01
      %v480 = vadd.f32 %v321, 0.01
      %v481 = vadd.f32 %v333, 0.01
      %v482 = vadd.f32 %v345, 0.01
      %v483 = vadd.f32 %v357, 0.01
      %v484 = vadd.f32 %v369, 0.01
      %v485 = vadd.f32 %v381, 0.01
      %v486 = vadd.f32 %v393, 0.01
      %v487 = vadd.f32 %v405, 0.01
      %v488 = vadd.f32 %v417, 0.01
      %v489 = vadd.f32 %v429, 0.01
      %v490 = vadd.f32 %v441, 0.01
      %v491 = vadd.f32 %v453, 0.01
      %v492 = vadd.f32 %v465, 0.01
      %v493 = vadd.f32 %v477, 0.01
      %v494 = vrcp.pop %v478
      %v495 = vrcp.pop %v479
      %v496 = vrcp.pop %v480
      %v497 = vrcp.pop %v481
      %v498 = vrcp.pop %v482
      %v499 = vrcp.pop %v483
      %v500 = vrcp.pop %v484
      %v501 = vrcp.pop %v485
      %v502 = vrcp.pop %v486
      %v503 = vrcp.pop %v487
      %v504 = vrcp.pop %v488
      %v505 = vrcp.pop %v489
      %v506 = vrcp.pop %v490
      %v507 = vrcp.pop %v491
      %v508 = vrcp.pop %v492
      %v509 = vrcp.pop %v493
      %v510 = vmul.f32 %v198, %v494
      %v511 = vmul.f32 %v199, %v495
      %v512 = vmul.f32 %v200, %v496
      %v513 = vmul.f32 %v201, %v497
      %v514 = vmul.f32 %v202, %v498
      %v515 = vmul.f32 %v203, %v499
      %v516 = vmul.f32 %v204, %v500
      %v517 = vmul.f32 %v205, %v501
      %v518 = vmul.f32 %v206, %v502
      %v519 = vmul.f32 %v207, %v503
      %v520 = vmul.f32 %v208, %v504
      %v521 = vmul.f32 %v209, %v505
      %v522 = vmul.f32 %v210, %v506
      %v523 = vmul.f32 %v211, %v507
      %v524 = vmul.f32 %v212, %v508
      %v525 = vmul.f32 %v213, %v509
      %v527 = vperm.slane %v214, 0
      %v529 = vmul.f32 %v510, %v527
      %v530 = vmul.f32 %v511, %v527
      %v531 = vmul.f32 %v512, %v527
      %v532 = vmul.f32 %v513, %v527
      %v533 = vmul.f32 %v514, %v527
      %v534 = vmul.f32 %v515, %v527
      %v535 = vmul.f32 %v516, %v527
      %v536 = vmul.f32 %v517, %v527
      %v537 = vmul.f32 %v518, %v527
      %v538 = vmul.f32 %v519, %v527
      %v539 = vmul.f32 %v520, %v527
      %v540 = vmul.f32 %v521, %v527
      %v541 = vmul.f32 %v522, %v527
      %v542 = vmul.f32 %v523, %v527
      %v543 = vmul.f32 %v524, %v527
      %v544 = vmul.f32 %v525, %v527
      %545 = vxpose.xlu0.b32.start [1/16] %v529, 128
      %546 = vxpose.xlu0.b32.cont [2/16] %v530, 128
      %547 = vxpose.xlu0.b32.cont [3/16] %v531, 128
      %548 = vxpose.xlu0.b32.cont [4/16] %v532, 128
      %549 = vxpose.xlu0.b32.cont [5/16] %v533, 128
      %550 = vxpose.xlu0.b32.cont [6/16] %v534, 128
      %551 = vxpose.xlu0.b32.cont [7/16] %v535, 128
      %552 = vxpose.xlu0.b32.cont [8/16] %v536, 128
      %553 = vxpose.xlu0.b32.cont [9/16] %v537, 128
      %554 = vxpose.xlu0.b32.cont [10/16] %v538, 128
      %555 = vxpose.xlu0.b32.cont [11/16] %v539, 128
      %556 = vxpose.xlu0.b32.cont [12/16] %v540, 128
      %557 = vxpose.xlu0.b32.cont [13/16] %v541, 128
      %558 = vxpose.xlu0.b32.cont [14/16] %v542, 128
      %559 = vxpose.xlu0.b32.cont [15/16] %v543, 128
      %560 = vxpose.xlu0.b32.end [16/16] %v544, 128
      %v561 = vpop.trf.xlu0
      %v562 = vpop.trf.xlu0
      %v563 = vpop.trf.xlu0
      %v564 = vpop.trf.xlu0
      %v565 = vpop.trf.xlu0
      %v566 = vpop.trf.xlu0
      %v567 = vpop.trf.xlu0
      %v568 = vpop.trf.xlu0
      %v569 = vpop.trf.xlu0
      %v570 = vpop.trf.xlu0
      %v571 = vpop.trf.xlu0
      %v572 = vpop.trf.xlu0
      %v573 = vpop.trf.xlu0
      %v574 = vpop.trf.xlu0
      %v575 = vpop.trf.xlu0
      %v576 = vpop.trf.xlu0
      %v577 = vpack.c.bf16 %v562, %v561
      %v578 = vpack.c.bf16 %v564, %v563
      %v579 = vpack.c.bf16 %v566, %v565
      %v580 = vpack.c.bf16 %v568, %v567
      %v581 = vpack.c.bf16 %v570, %v569
      %v582 = vpack.c.bf16 %v572, %v571
      %v583 = vpack.c.bf16 %v574, %v573
      %v584 = vpack.c.bf16 %v576, %v575
      %v585 = vld [vmem:[%s2] sm:$0xf]
      %v586 = vld [vmem:[%s2 + $0x4] sm:$0xf]
      %v587 = vld [vmem:[%s2 + $0x8] sm:$0xf]
      %v588 = vld [vmem:[%s2 + $0xc] sm:$0xf]
      %v589 = vld [vmem:[%s2 + $0x10] sm:$0xf]
      %v590 = vld [vmem:[%s2 + $0x14] sm:$0xf]
      %v591 = vld [vmem:[%s2 + $0x18] sm:$0xf]
      %v592 = vld [vmem:[%s2 + $0x1c] sm:$0xf]
      %v593 = vld [vmem:[%s2 + $0x20] sm:$0xf]
      %v594 = vld [vmem:[%s2 + $0x24] sm:$0xf]
      %v595 = vld [vmem:[%s2 + $0x28] sm:$0xf]
      %v596 = vld [vmem:[%s2 + $0x2c] sm:$0xf]
      %v597 = vld [vmem:[%s2 + $0x30] sm:$0xf]
      %v598 = vld [vmem:[%s2 + $0x34] sm:$0xf]
      %v599 = vld [vmem:[%s2 + $0x38] sm:$0xf]
      %v600 = vld [vmem:[%s2 + $0x3c] sm:$0xf]
      %v617 = vunpack.c.l.b16 %v585
      %v618 = vunpack.c.l.b16 %v586
      %v619 = vunpack.c.l.b16 %v587
      %v620 = vunpack.c.l.b16 %v588
      %v621 = vunpack.c.l.b16 %v589
      %v622 = vunpack.c.l.b16 %v590
      %v623 = vunpack.c.l.b16 %v591
      %v624 = vunpack.c.l.b16 %v592
      %v625 = vunpack.c.l.b16 %v593
      %v626 = vunpack.c.l.b16 %v594
      %v627 = vunpack.c.l.b16 %v595
      %v628 = vunpack.c.l.b16 %v596
      %v629 = vunpack.c.l.b16 %v597
      %v630 = vunpack.c.l.b16 %v598
      %v631 = vunpack.c.l.b16 %v599
      %v632 = vunpack.c.l.b16 %v600
      %v633 = vpack.c.b16 %v618, %v617
      %v634 = vpack.c.b16 %v620, %v619
      %v635 = vpack.c.b16 %v622, %v621
      %v636 = vpack.c.b16 %v624, %v623
      %v637 = vpack.c.b16 %v626, %v625
      %v638 = vpack.c.b16 %v628, %v627
      %v639 = vpack.c.b16 %v630, %v629
      %v640 = vpack.c.b16 %v632, %v631
      %649 = vmatpush.bf16.msra.mxu0 %v640
      %650 = vmatpush.bf16.msra.mxu0 %v639
      %651 = vmatpush.bf16.msra.mxu0 %v638
      %652 = vmatpush.bf16.msra.mxu0 %v637
      %653 = vmatpush.bf16.msra.mxu0 %v636
      %654 = vmatpush.bf16.msra.mxu0 %v635
      %655 = vmatpush.bf16.msra.mxu0 %v634
      %656 = vmatpush.bf16.msra.mxu0 %v633
      %657 = vmatmul.bf16.gmra.mxu0 %v577
      %v658 = vpop.f32.mrf.mxu0
      %v659 = vadd.f32 0.0, %v658
      %v660 = vpop.f32.mrf.mxu0
      %v661 = vadd.f32 0.0, %v660
      %662 = vmatmul.bf16.gmra.mxu0 %v578
      %v663 = vpop.f32.mrf.mxu0
      %v664 = vadd.f32 0.0, %v663
      %v665 = vpop.f32.mrf.mxu0
      %v666 = vadd.f32 0.0, %v665
      %667 = vmatmul.bf16.gmra.mxu0 %v579
      %v668 = vpop.f32.mrf.mxu0
      %v669 = vadd.f32 0.0, %v668
      %v670 = vpop.f32.mrf.mxu0
      %v671 = vadd.f32 0.0, %v670
      %672 = vmatmul.bf16.gmra.mxu0 %v580
      %v673 = vpop.f32.mrf.mxu0
      %v674 = vadd.f32 0.0, %v673
      %v675 = vpop.f32.mrf.mxu0
      %v676 = vadd.f32 0.0, %v675
      %677 = vmatmul.bf16.gmra.mxu0 %v581
      %v678 = vpop.f32.mrf.mxu0
      %v679 = vadd.f32 0.0, %v678
      %v680 = vpop.f32.mrf.mxu0
      %v681 = vadd.f32 0.0, %v680
      %682 = vmatmul.bf16.gmra.mxu0 %v582
      %v683 = vpop.f32.mrf.mxu0
      %v684 = vadd.f32 0.0, %v683
      %v685 = vpop.f32.mrf.mxu0
      %v686 = vadd.f32 0.0, %v685
      %687 = vmatmul.bf16.gmra.mxu0 %v583
      %v688 = vpop.f32.mrf.mxu0
      %v689 = vadd.f32 0.0, %v688
      %v690 = vpop.f32.mrf.mxu0
      %v691 = vadd.f32 0.0, %v690
      %692 = vmatmul.bf16.gmra.mxu0 %v584
      %v693 = vpop.f32.mrf.mxu0
      %v694 = vadd.f32 0.0, %v693
      %v695 = vpop.f32.mrf.mxu0
      %v696 = vadd.f32 0.0, %v695
      %697 = vdwg.mxu0
      %v698 = vadd.f32 %v198, %v659
      %v699 = vadd.f32 %v199, %v661
      %v700 = vadd.f32 %v200, %v664
      %v701 = vadd.f32 %v201, %v666
      %v702 = vadd.f32 %v202, %v669
      %v703 = vadd.f32 %v203, %v671
      %v704 = vadd.f32 %v204, %v674
      %v705 = vadd.f32 %v205, %v676
      %v706 = vadd.f32 %v206, %v679
      %v707 = vadd.f32 %v207, %v681
      %v708 = vadd.f32 %v208, %v684
      %v709 = vadd.f32 %v209, %v686
      %v710 = vadd.f32 %v210, %v689
      %v711 = vadd.f32 %v211, %v691
      %v712 = vadd.f32 %v212, %v694
      %v713 = vadd.f32 %v213, %v696
      %v714 = vld [vmem:[%s3] sm:$0x1]
      %v715 = vmul.f32 %v698, %v698
      %v716 = vmul.f32 %v699, %v699
      %v717 = vmul.f32 %v700, %v700
      %v718 = vmul.f32 %v701, %v701
      %v719 = vmul.f32 %v702, %v702
      %v720 = vmul.f32 %v703, %v703
      %v721 = vmul.f32 %v704, %v704
      %v722 = vmul.f32 %v705, %v705
      %v723 = vmul.f32 %v706, %v706
      %v724 = vmul.f32 %v707, %v707
      %v725 = vmul.f32 %v708, %v708
      %v726 = vmul.f32 %v709, %v709
      %v727 = vmul.f32 %v710, %v710
      %v728 = vmul.f32 %v711, %v711
      %v729 = vmul.f32 %v712, %v712
      %v730 = vmul.f32 %v713, %v713
      %731 = vadd.xlane.f32.xlu0 %v715
      %v732 = vpop.xlane.xlu0 %731
      %733 = vadd.xlane.f32.xlu0 %v716
      %v734 = vpop.xlane.xlu0 %733
      %735 = vadd.xlane.f32.xlu0 %v717
      %v736 = vpop.xlane.xlu0 %735
      %737 = vadd.xlane.f32.xlu0 %v718
      %v738 = vpop.xlane.xlu0 %737
      %739 = vadd.xlane.f32.xlu0 %v719
      %v740 = vpop.xlane.xlu0 %739
      %741 = vadd.xlane.f32.xlu0 %v720
      %v742 = vpop.xlane.xlu0 %741
      %743 = vadd.xlane.f32.xlu0 %v721
      %v744 = vpop.xlane.xlu0 %743
      %745 = vadd.xlane.f32.xlu0 %v722
      %v746 = vpop.xlane.xlu0 %745
      %747 = vadd.xlane.f32.xlu0 %v723
      %v748 = vpop.xlane.xlu0 %747
      %749 = vadd.xlane.f32.xlu0 %v724
      %v750 = vpop.xlane.xlu0 %749
      %751 = vadd.xlane.f32.xlu0 %v725
      %v752 = vpop.xlane.xlu0 %751
      %753 = vadd.xlane.f32.xlu0 %v726
      %v754 = vpop.xlane.xlu0 %753
      %755 = vadd.xlane.f32.xlu0 %v727
      %v756 = vpop.xlane.xlu0 %755
      %757 = vadd.xlane.f32.xlu0 %v728
      %v758 = vpop.xlane.xlu0 %757
      %759 = vadd.xlane.f32.xlu0 %v729
      %v760 = vpop.xlane.xlu0 %759
      %761 = vadd.xlane.f32.xlu0 %v730
      %v762 = vpop.xlane.xlu0 %761
      %v763 = vmul.f32 %v732, %v269
      %v764 = vmul.f32 %v734, %v269
      %v765 = vmul.f32 %v736, %v269
      %v766 = vmul.f32 %v738, %v269
      %v767 = vmul.f32 %v740, %v269
      %v768 = vmul.f32 %v742, %v269
      %v769 = vmul.f32 %v744, %v269
      %v770 = vmul.f32 %v746, %v269
      %v771 = vmul.f32 %v748, %v269
      %v772 = vmul.f32 %v750, %v269
      %v773 = vmul.f32 %v752, %v269
      %v774 = vmul.f32 %v754, %v269
      %v775 = vmul.f32 %v756, %v269
      %v776 = vmul.f32 %v758, %v269
      %v777 = vmul.f32 %v760, %v269
      %v778 = vmul.f32 %v762, %v269
      %v779 = vrsqrt.pop %v763
      %v780 = vmul.f32 %v779, %v763
      %v781 = vmul.f32 %v780, %v779
      %v782 = vmul.f32 0.5, %v781
      %v783 = vsub.f32 1.5, %v782
      %v784 = vmul.f32 %v779, %v783
      %v785 = vmul.f32 %v763, %v784
      %vm786 = vcmp.eq.f32.partialorder %v763, inf
      %v787 = vsel %vm786, %v763, %v785
      %vm788 = vcmp.eq.f32.partialorder %v763, 0.0
      %v789 = vand.u32 %v763, 2147483648
      %v790 = vsel %vm788, %v789, %v787
      %v791 = vrsqrt.pop %v764
      %v792 = vmul.f32 %v791, %v764
      %v793 = vmul.f32 %v792, %v791
      %v794 = vmul.f32 0.5, %v793
      %v795 = vsub.f32 1.5, %v794
      %v796 = vmul.f32 %v791, %v795
      %v797 = vmul.f32 %v764, %v796
      %vm798 = vcmp.eq.f32.partialorder %v764, inf
      %v799 = vsel %vm798, %v764, %v797
      %vm800 = vcmp.eq.f32.partialorder %v764, 0.0
      %v801 = vand.u32 %v764, 2147483648
      %v802 = vsel %vm800, %v801, %v799
      %v803 = vrsqrt.pop %v765
      %v804 = vmul.f32 %v803, %v765
      %v805 = vmul.f32 %v804, %v803
      %v806 = vmul.f32 0.5, %v805
      %v807 = vsub.f32 1.5, %v806
      %v808 = vmul.f32 %v803, %v807
      %v809 = vmul.f32 %v765, %v808
      %vm810 = vcmp.eq.f32.partialorder %v765, inf
      %v811 = vsel %vm810, %v765, %v809
      %vm812 = vcmp.eq.f32.partialorder %v765, 0.0
      %v813 = vand.u32 %v765, 2147483648
      %v814 = vsel %vm812, %v813, %v811
      %v815 = vrsqrt.pop %v766
      %v816 = vmul.f32 %v815, %v766
      %v817 = vmul.f32 %v816, %v815
      %v818 = vmul.f32 0.5, %v817
      %v819 = vsub.f32 1.5, %v818
      %v820 = vmul.f32 %v815, %v819
      %v821 = vmul.f32 %v766, %v820
      %vm822 = vcmp.eq.f32.partialorder %v766, inf
      %v823 = vsel %vm822, %v766, %v821
      %vm824 = vcmp.eq.f32.partialorder %v766, 0.0
      %v825 = vand.u32 %v766, 2147483648
      %v826 = vsel %vm824, %v825, %v823
      %v827 = vrsqrt.pop %v767
      %v828 = vmul.f32 %v827, %v767
      %v829 = vmul.f32 %v828, %v827
      %v830 = vmul.f32 0.5, %v829
      %v831 = vsub.f32 1.5, %v830
      %v832 = vmul.f32 %v827, %v831
      %v833 = vmul.f32 %v767, %v832
      %vm834 = vcmp.eq.f32.partialorder %v767, inf
      %v835 = vsel %vm834, %v767, %v833
      %vm836 = vcmp.eq.f32.partialorder %v767, 0.0
      %v837 = vand.u32 %v767, 2147483648
      %v838 = vsel %vm836, %v837, %v835
      %v839 = vrsqrt.pop %v768
      %v840 = vmul.f32 %v839, %v768
      %v841 = vmul.f32 %v840, %v839
      %v842 = vmul.f32 0.5, %v841
      %v843 = vsub.f32 1.5, %v842
      %v844 = vmul.f32 %v839, %v843
      %v845 = vmul.f32 %v768, %v844
      %vm846 = vcmp.eq.f32.partialorder %v768, inf
      %v847 = vsel %vm846, %v768, %v845
      %vm848 = vcmp.eq.f32.partialorder %v768, 0.0
      %v849 = vand.u32 %v768, 2147483648
      %v850 = vsel %vm848, %v849, %v847
      %v851 = vrsqrt.pop %v769
      %v852 = vmul.f32 %v851, %v769
      %v853 = vmul.f32 %v852, %v851
      %v854 = vmul.f32 0.5, %v853
      %v855 = vsub.f32 1.5, %v854
      %v856 = vmul.f32 %v851, %v855
      %v857 = vmul.f32 %v769, %v856
      %vm858 = vcmp.eq.f32.partialorder %v769, inf
      %v859 = vsel %vm858, %v769, %v857
      %vm860 = vcmp.eq.f32.partialorder %v769, 0.0
      %v861 = vand.u32 %v769, 2147483648
      %v862 = vsel %vm860, %v861, %v859
      %v863 = vrsqrt.pop %v770
      %v864 = vmul.f32 %v863, %v770
      %v865 = vmul.f32 %v864, %v863
      %v866 = vmul.f32 0.5, %v865
      %v867 = vsub.f32 1.5, %v866
      %v868 = vmul.f32 %v863, %v867
      %v869 = vmul.f32 %v770, %v868
      %vm870 = vcmp.eq.f32.partialorder %v770, inf
      %v871 = vsel %vm870, %v770, %v869
      %vm872 = vcmp.eq.f32.partialorder %v770, 0.0
      %v873 = vand.u32 %v770, 2147483648
      %v874 = vsel %vm872, %v873, %v871
      %v875 = vrsqrt.pop %v771
      %v876 = vmul.f32 %v875, %v771
      %v877 = vmul.f32 %v876, %v875
      %v878 = vmul.f32 0.5, %v877
      %v879 = vsub.f32 1.5, %v878
      %v880 = vmul.f32 %v875, %v879
      %v881 = vmul.f32 %v771, %v880
      %vm882 = vcmp.eq.f32.partialorder %v771, inf
      %v883 = vsel %vm882, %v771, %v881
      %vm884 = vcmp.eq.f32.partialorder %v771, 0.0
      %v885 = vand.u32 %v771, 2147483648
      %v886 = vsel %vm884, %v885, %v883
      %v887 = vrsqrt.pop %v772
      %v888 = vmul.f32 %v887, %v772
      %v889 = vmul.f32 %v888, %v887
      %v890 = vmul.f32 0.5, %v889
      %v891 = vsub.f32 1.5, %v890
      %v892 = vmul.f32 %v887, %v891
      %v893 = vmul.f32 %v772, %v892
      %vm894 = vcmp.eq.f32.partialorder %v772, inf
      %v895 = vsel %vm894, %v772, %v893
      %vm896 = vcmp.eq.f32.partialorder %v772, 0.0
      %v897 = vand.u32 %v772, 2147483648
      %v898 = vsel %vm896, %v897, %v895
      %v899 = vrsqrt.pop %v773
      %v900 = vmul.f32 %v899, %v773
      %v901 = vmul.f32 %v900, %v899
      %v902 = vmul.f32 0.5, %v901
      %v903 = vsub.f32 1.5, %v902
      %v904 = vmul.f32 %v899, %v903
      %v905 = vmul.f32 %v773, %v904
      %vm906 = vcmp.eq.f32.partialorder %v773, inf
      %v907 = vsel %vm906, %v773, %v905
      %vm908 = vcmp.eq.f32.partialorder %v773, 0.0
      %v909 = vand.u32 %v773, 2147483648
      %v910 = vsel %vm908, %v909, %v907
      %v911 = vrsqrt.pop %v774
      %v912 = vmul.f32 %v911, %v774
      %v913 = vmul.f32 %v912, %v911
      %v914 = vmul.f32 0.5, %v913
      %v915 = vsub.f32 1.5, %v914
      %v916 = vmul.f32 %v911, %v915
      %v917 = vmul.f32 %v774, %v916
      %vm918 = vcmp.eq.f32.partialorder %v774, inf
      %v919 = vsel %vm918, %v774, %v917
      %vm920 = vcmp.eq.f32.partialorder %v774, 0.0
      %v921 = vand.u32 %v774, 2147483648
      %v922 = vsel %vm920, %v921, %v919
      %v923 = vrsqrt.pop %v775
      %v924 = vmul.f32 %v923, %v775
      %v925 = vmul.f32 %v924, %v923
      %v926 = vmul.f32 0.5, %v925
      %v927 = vsub.f32 1.5, %v926
      %v928 = vmul.f32 %v923, %v927
      %v929 = vmul.f32 %v775, %v928
      %vm930 = vcmp.eq.f32.partialorder %v775, inf
      %v931 = vsel %vm930, %v775, %v929
      %vm932 = vcmp.eq.f32.partialorder %v775, 0.0
      %v933 = vand.u32 %v775, 2147483648
      %v934 = vsel %vm932, %v933, %v931
      %v935 = vrsqrt.pop %v776
      %v936 = vmul.f32 %v935, %v776
      %v937 = vmul.f32 %v936, %v935
      %v938 = vmul.f32 0.5, %v937
      %v939 = vsub.f32 1.5, %v938
      %v940 = vmul.f32 %v935, %v939
      %v941 = vmul.f32 %v776, %v940
      %vm942 = vcmp.eq.f32.partialorder %v776, inf
      %v943 = vsel %vm942, %v776, %v941
      %vm944 = vcmp.eq.f32.partialorder %v776, 0.0
      %v945 = vand.u32 %v776, 2147483648
      %v946 = vsel %vm944, %v945, %v943
      %v947 = vrsqrt.pop %v777
      %v948 = vmul.f32 %v947, %v777
      %v949 = vmul.f32 %v948, %v947
      %v950 = vmul.f32 0.5, %v949
      %v951 = vsub.f32 1.5, %v950
      %v952 = vmul.f32 %v947, %v951
      %v953 = vmul.f32 %v777, %v952
      %vm954 = vcmp.eq.f32.partialorder %v777, inf
      %v955 = vsel %vm954, %v777, %v953
      %vm956 = vcmp.eq.f32.partialorder %v777, 0.0
      %v957 = vand.u32 %v777, 2147483648
      %v958 = vsel %vm956, %v957, %v955
      %v959 = vrsqrt.pop %v778
      %v960 = vmul.f32 %v959, %v778
      %v961 = vmul.f32 %v960, %v959
      %v962 = vmul.f32 0.5, %v961
      %v963 = vsub.f32 1.5, %v962
      %v964 = vmul.f32 %v959, %v963
      %v965 = vmul.f32 %v778, %v964
      %vm966 = vcmp.eq.f32.partialorder %v778, inf
      %v967 = vsel %vm966, %v778, %v965
      %vm968 = vcmp.eq.f32.partialorder %v778, 0.0
      %v969 = vand.u32 %v778, 2147483648
      %v970 = vsel %vm968, %v969, %v967
      %v971 = vadd.f32 %v790, 0.01
      %v972 = vadd.f32 %v802, 0.01
      %v973 = vadd.f32 %v814, 0.01
      %v974 = vadd.f32 %v826, 0.01
      %v975 = vadd.f32 %v838, 0.01
      %v976 = vadd.f32 %v850, 0.01
      %v977 = vadd.f32 %v862, 0.01
      %v978 = vadd.f32 %v874, 0.01
      %v979 = vadd.f32 %v886, 0.01
      %v980 = vadd.f32 %v898, 0.01
      %v981 = vadd.f32 %v910, 0.01
      %v982 = vadd.f32 %v922, 0.01
      %v983 = vadd.f32 %v934, 0.01
      %v984 = vadd.f32 %v946, 0.01
      %v985 = vadd.f32 %v958, 0.01
      %v986 = vadd.f32 %v970, 0.01
      %v987 = vrcp.pop %v971
      %v988 = vrcp.pop %v972
      %v989 = vrcp.pop %v973
      %v990 = vrcp.pop %v974
      %v991 = vrcp.pop %v975
      %v992 = vrcp.pop %v976
      %v993 = vrcp.pop %v977
      %v994 = vrcp.pop %v978
      %v995 = vrcp.pop %v979
      %v996 = vrcp.pop %v980
      %v997 = vrcp.pop %v981
      %v998 = vrcp.pop %v982
      %v999 = vrcp.pop %v983
      %v1000 = vrcp.pop %v984
      %v1001 = vrcp.pop %v985
      %v1002 = vrcp.pop %v986
      %v1003 = vmul.f32 %v698, %v987
      %v1004 = vmul.f32 %v699, %v988
      %v1005 = vmul.f32 %v700, %v989
      %v1006 = vmul.f32 %v701, %v990
      %v1007 = vmul.f32 %v702, %v991
      %v1008 = vmul.f32 %v703, %v992
      %v1009 = vmul.f32 %v704, %v993
      %v1010 = vmul.f32 %v705, %v994
      %v1011 = vmul.f32 %v706, %v995
      %v1012 = vmul.f32 %v707, %v996
      %v1013 = vmul.f32 %v708, %v997
      %v1014 = vmul.f32 %v709, %v998
      %v1015 = vmul.f32 %v710, %v999
      %v1016 = vmul.f32 %v711, %v1000
      %v1017 = vmul.f32 %v712, %v1001
      %v1018 = vmul.f32 %v713, %v1002
      %v1020 = vperm.slane %v714, 0
      %v1022 = vmul.f32 %v1003, %v1020
      %v1023 = vmul.f32 %v1004, %v1020
      %v1024 = vmul.f32 %v1005, %v1020
      %v1025 = vmul.f32 %v1006, %v1020
      %v1026 = vmul.f32 %v1007, %v1020
      %v1027 = vmul.f32 %v1008, %v1020
      %v1028 = vmul.f32 %v1009, %v1020
      %v1029 = vmul.f32 %v1010, %v1020
      %v1030 = vmul.f32 %v1011, %v1020
      %v1031 = vmul.f32 %v1012, %v1020
      %v1032 = vmul.f32 %v1013, %v1020
      %v1033 = vmul.f32 %v1014, %v1020
      %v1034 = vmul.f32 %v1015, %v1020
      %v1035 = vmul.f32 %v1016, %v1020
      %v1036 = vmul.f32 %v1017, %v1020
      %v1037 = vmul.f32 %v1018, %v1020
      %v1038 = vmul.f32 %v1022, %v1022
      %v1039 = vmul.f32 %v1023, %v1023
      %v1040 = vmul.f32 %v1024, %v1024
      %v1041 = vmul.f32 %v1025, %v1025
      %v1042 = vmul.f32 %v1026, %v1026
      %v1043 = vmul.f32 %v1027, %v1027
      %v1044 = vmul.f32 %v1028, %v1028
      %v1045 = vmul.f32 %v1029, %v1029
      %v1046 = vmul.f32 %v1030, %v1030
      %v1047 = vmul.f32 %v1031, %v1031
      %v1048 = vmul.f32 %v1032, %v1032
      %v1049 = vmul.f32 %v1033, %v1033
      %v1050 = vmul.f32 %v1034, %v1034
      %v1051 = vmul.f32 %v1035, %v1035
      %v1052 = vmul.f32 %v1036, %v1036
      %v1053 = vmul.f32 %v1037, %v1037
      %1054 = vadd.xlane.f32.xlu0 %v1038
      %v1055 = vpop.xlane.xlu0 %1054
      %1056 = vadd.xlane.f32.xlu0 %v1039
      %v1057 = vpop.xlane.xlu0 %1056
      %1058 = vadd.xlane.f32.xlu0 %v1040
      %v1059 = vpop.xlane.xlu0 %1058
      %1060 = vadd.xlane.f32.xlu0 %v1041
      %v1061 = vpop.xlane.xlu0 %1060
      %1062 = vadd.xlane.f32.xlu0 %v1042
      %v1063 = vpop.xlane.xlu0 %1062
      %1064 = vadd.xlane.f32.xlu0 %v1043
      %v1065 = vpop.xlane.xlu0 %1064
      %1066 = vadd.xlane.f32.xlu0 %v1044
      %v1067 = vpop.xlane.xlu0 %1066
      %1068 = vadd.xlane.f32.xlu0 %v1045
      %v1069 = vpop.xlane.xlu0 %1068
      %1070 = vadd.xlane.f32.xlu0 %v1046
      %v1071 = vpop.xlane.xlu0 %1070
      %1072 = vadd.xlane.f32.xlu0 %v1047
      %v1073 = vpop.xlane.xlu0 %1072
      %1074 = vadd.xlane.f32.xlu0 %v1048
      %v1075 = vpop.xlane.xlu0 %1074
      %1076 = vadd.xlane.f32.xlu0 %v1049
      %v1077 = vpop.xlane.xlu0 %1076
      %1078 = vadd.xlane.f32.xlu0 %v1050
      %v1079 = vpop.xlane.xlu0 %1078
      %1080 = vadd.xlane.f32.xlu0 %v1051
      %v1081 = vpop.xlane.xlu0 %1080
      %1082 = vadd.xlane.f32.xlu0 %v1052
      %v1083 = vpop.xlane.xlu0 %1082
      %1084 = vadd.xlane.f32.xlu0 %v1053
      %v1085 = vpop.xlane.xlu0 %1084
      %v1086 = vmul.f32 %v1055, %v269
      %v1087 = vmul.f32 %v1057, %v269
      %v1088 = vmul.f32 %v1059, %v269
      %v1089 = vmul.f32 %v1061, %v269
      %v1090 = vmul.f32 %v1063, %v269
      %v1091 = vmul.f32 %v1065, %v269
      %v1092 = vmul.f32 %v1067, %v269
      %v1093 = vmul.f32 %v1069, %v269
      %v1094 = vmul.f32 %v1071, %v269
      %v1095 = vmul.f32 %v1073, %v269
      %v1096 = vmul.f32 %v1075, %v269
      %v1097 = vmul.f32 %v1077, %v269
      %v1098 = vmul.f32 %v1079, %v269
      %v1099 = vmul.f32 %v1081, %v269
      %v1100 = vmul.f32 %v1083, %v269
      %v1101 = vmul.f32 %v1085, %v269
      %v1102 = vrsqrt.pop %v1086
      %v1103 = vmul.f32 %v1102, %v1086
      %v1104 = vmul.f32 %v1103, %v1102
      %v1105 = vmul.f32 0.5, %v1104
      %v1106 = vsub.f32 1.5, %v1105
      %v1107 = vmul.f32 %v1102, %v1106
      %v1108 = vmul.f32 %v1086, %v1107
      %vm1109 = vcmp.eq.f32.partialorder %v1086, inf
      %v1110 = vsel %vm1109, %v1086, %v1108
      %vm1111 = vcmp.eq.f32.partialorder %v1086, 0.0
      %v1112 = vand.u32 %v1086, 2147483648
      %v1113 = vsel %vm1111, %v1112, %v1110
      %v1114 = vrsqrt.pop %v1087
      %v1115 = vmul.f32 %v1114, %v1087
      %v1116 = vmul.f32 %v1115, %v1114
      %v1117 = vmul.f32 0.5, %v1116
      %v1118 = vsub.f32 1.5, %v1117
      %v1119 = vmul.f32 %v1114, %v1118
      %v1120 = vmul.f32 %v1087, %v1119
      %vm1121 = vcmp.eq.f32.partialorder %v1087, inf
      %v1122 = vsel %vm1121, %v1087, %v1120
      %vm1123 = vcmp.eq.f32.partialorder %v1087, 0.0
      %v1124 = vand.u32 %v1087, 2147483648
      %v1125 = vsel %vm1123, %v1124, %v1122
      %v1126 = vrsqrt.pop %v1088
      %v1127 = vmul.f32 %v1126, %v1088
      %v1128 = vmul.f32 %v1127, %v1126
      %v1129 = vmul.f32 0.5, %v1128
      %v1130 = vsub.f32 1.5, %v1129
      %v1131 = vmul.f32 %v1126, %v1130
      %v1132 = vmul.f32 %v1088, %v1131
      %vm1133 = vcmp.eq.f32.partialorder %v1088, inf
      %v1134 = vsel %vm1133, %v1088, %v1132
      %vm1135 = vcmp.eq.f32.partialorder %v1088, 0.0
      %v1136 = vand.u32 %v1088, 2147483648
      %v1137 = vsel %vm1135, %v1136, %v1134
      %v1138 = vrsqrt.pop %v1089
      %v1139 = vmul.f32 %v1138, %v1089
      %v1140 = vmul.f32 %v1139, %v1138
      %v1141 = vmul.f32 0.5, %v1140
      %v1142 = vsub.f32 1.5, %v1141
      %v1143 = vmul.f32 %v1138, %v1142
      %v1144 = vmul.f32 %v1089, %v1143
      %vm1145 = vcmp.eq.f32.partialorder %v1089, inf
      %v1146 = vsel %vm1145, %v1089, %v1144
      %vm1147 = vcmp.eq.f32.partialorder %v1089, 0.0
      %v1148 = vand.u32 %v1089, 2147483648
      %v1149 = vsel %vm1147, %v1148, %v1146
      %v1150 = vrsqrt.pop %v1090
      %v1151 = vmul.f32 %v1150, %v1090
      %v1152 = vmul.f32 %v1151, %v1150
      %v1153 = vmul.f32 0.5, %v1152
      %v1154 = vsub.f32 1.5, %v1153
      %v1155 = vmul.f32 %v1150, %v1154
      %v1156 = vmul.f32 %v1090, %v1155
      %vm1157 = vcmp.eq.f32.partialorder %v1090, inf
      %v1158 = vsel %vm1157, %v1090, %v1156
      %vm1159 = vcmp.eq.f32.partialorder %v1090, 0.0
      %v1160 = vand.u32 %v1090, 2147483648
      %v1161 = vsel %vm1159, %v1160, %v1158
      %v1162 = vrsqrt.pop %v1091
      %v1163 = vmul.f32 %v1162, %v1091
      %v1164 = vmul.f32 %v1163, %v1162
      %v1165 = vmul.f32 0.5, %v1164
      %v1166 = vsub.f32 1.5, %v1165
      %v1167 = vmul.f32 %v1162, %v1166
      %v1168 = vmul.f32 %v1091, %v1167
      %vm1169 = vcmp.eq.f32.partialorder %v1091, inf
      %v1170 = vsel %vm1169, %v1091, %v1168
      %vm1171 = vcmp.eq.f32.partialorder %v1091, 0.0
      %v1172 = vand.u32 %v1091, 2147483648
      %v1173 = vsel %vm1171, %v1172, %v1170
      %v1174 = vrsqrt.pop %v1092
      %v1175 = vmul.f32 %v1174, %v1092
      %v1176 = vmul.f32 %v1175, %v1174
      %v1177 = vmul.f32 0.5, %v1176
      %v1178 = vsub.f32 1.5, %v1177
      %v1179 = vmul.f32 %v1174, %v1178
      %v1180 = vmul.f32 %v1092, %v1179
      %vm1181 = vcmp.eq.f32.partialorder %v1092, inf
      %v1182 = vsel %vm1181, %v1092, %v1180
      %vm1183 = vcmp.eq.f32.partialorder %v1092, 0.0
      %v1184 = vand.u32 %v1092, 2147483648
      %v1185 = vsel %vm1183, %v1184, %v1182
      %v1186 = vrsqrt.pop %v1093
      %v1187 = vmul.f32 %v1186, %v1093
      %v1188 = vmul.f32 %v1187, %v1186
      %v1189 = vmul.f32 0.5, %v1188
      %v1190 = vsub.f32 1.5, %v1189
      %v1191 = vmul.f32 %v1186, %v1190
      %v1192 = vmul.f32 %v1093, %v1191
      %vm1193 = vcmp.eq.f32.partialorder %v1093, inf
      %v1194 = vsel %vm1193, %v1093, %v1192
      %vm1195 = vcmp.eq.f32.partialorder %v1093, 0.0
      %v1196 = vand.u32 %v1093, 2147483648
      %v1197 = vsel %vm1195, %v1196, %v1194
      %v1198 = vrsqrt.pop %v1094
      %v1199 = vmul.f32 %v1198, %v1094
      %v1200 = vmul.f32 %v1199, %v1198
      %v1201 = vmul.f32 0.5, %v1200
      %v1202 = vsub.f32 1.5, %v1201
      %v1203 = vmul.f32 %v1198, %v1202
      %v1204 = vmul.f32 %v1094, %v1203
      %vm1205 = vcmp.eq.f32.partialorder %v1094, inf
      %v1206 = vsel %vm1205, %v1094, %v1204
      %vm1207 = vcmp.eq.f32.partialorder %v1094, 0.0
      %v1208 = vand.u32 %v1094, 2147483648
      %v1209 = vsel %vm1207, %v1208, %v1206
      %v1210 = vrsqrt.pop %v1095
      %v1211 = vmul.f32 %v1210, %v1095
      %v1212 = vmul.f32 %v1211, %v1210
      %v1213 = vmul.f32 0.5, %v1212
      %v1214 = vsub.f32 1.5, %v1213
      %v1215 = vmul.f32 %v1210, %v1214
      %v1216 = vmul.f32 %v1095, %v1215
      %vm1217 = vcmp.eq.f32.partialorder %v1095, inf
      %v1218 = vsel %vm1217, %v1095, %v1216
      %vm1219 = vcmp.eq.f32.partialorder %v1095, 0.0
      %v1220 = vand.u32 %v1095, 2147483648
      %v1221 = vsel %vm1219, %v1220, %v1218
      %v1222 = vrsqrt.pop %v1096
      %v1223 = vmul.f32 %v1222, %v1096
      %v1224 = vmul.f32 %v1223, %v1222
      %v1225 = vmul.f32 0.5, %v1224
      %v1226 = vsub.f32 1.5, %v1225
      %v1227 = vmul.f32 %v1222, %v1226
      %v1228 = vmul.f32 %v1096, %v1227
      %vm1229 = vcmp.eq.f32.partialorder %v1096, inf
      %v1230 = vsel %vm1229, %v1096, %v1228
      %vm1231 = vcmp.eq.f32.partialorder %v1096, 0.0
      %v1232 = vand.u32 %v1096, 2147483648
      %v1233 = vsel %vm1231, %v1232, %v1230
      %v1234 = vrsqrt.pop %v1097
      %v1235 = vmul.f32 %v1234, %v1097
      %v1236 = vmul.f32 %v1235, %v1234
      %v1237 = vmul.f32 0.5, %v1236
      %v1238 = vsub.f32 1.5, %v1237
      %v1239 = vmul.f32 %v1234, %v1238
      %v1240 = vmul.f32 %v1097, %v1239
      %vm1241 = vcmp.eq.f32.partialorder %v1097, inf
      %v1242 = vsel %vm1241, %v1097, %v1240
      %vm1243 = vcmp.eq.f32.partialorder %v1097, 0.0
      %v1244 = vand.u32 %v1097, 2147483648
      %v1245 = vsel %vm1243, %v1244, %v1242
      %v1246 = vrsqrt.pop %v1098
      %v1247 = vmul.f32 %v1246, %v1098
      %v1248 = vmul.f32 %v1247, %v1246
      %v1249 = vmul.f32 0.5, %v1248
      %v1250 = vsub.f32 1.5, %v1249
      %v1251 = vmul.f32 %v1246, %v1250
      %v1252 = vmul.f32 %v1098, %v1251
      %vm1253 = vcmp.eq.f32.partialorder %v1098, inf
      %v1254 = vsel %vm1253, %v1098, %v1252
      %vm1255 = vcmp.eq.f32.partialorder %v1098, 0.0
      %v1256 = vand.u32 %v1098, 2147483648
      %v1257 = vsel %vm1255, %v1256, %v1254
      %v1258 = vrsqrt.pop %v1099
      %v1259 = vmul.f32 %v1258, %v1099
      %v1260 = vmul.f32 %v1259, %v1258
      %v1261 = vmul.f32 0.5, %v1260
      %v1262 = vsub.f32 1.5, %v1261
      %v1263 = vmul.f32 %v1258, %v1262
      %v1264 = vmul.f32 %v1099, %v1263
      %vm1265 = vcmp.eq.f32.partialorder %v1099, inf
      %v1266 = vsel %vm1265, %v1099, %v1264
      %vm1267 = vcmp.eq.f32.partialorder %v1099, 0.0
      %v1268 = vand.u32 %v1099, 2147483648
      %v1269 = vsel %vm1267, %v1268, %v1266
      %v1270 = vrsqrt.pop %v1100
      %v1271 = vmul.f32 %v1270, %v1100
      %v1272 = vmul.f32 %v1271, %v1270
      %v1273 = vmul.f32 0.5, %v1272
      %v1274 = vsub.f32 1.5, %v1273
      %v1275 = vmul.f32 %v1270, %v1274
      %v1276 = vmul.f32 %v1100, %v1275
      %vm1277 = vcmp.eq.f32.partialorder %v1100, inf
      %v1278 = vsel %vm1277, %v1100, %v1276
      %vm1279 = vcmp.eq.f32.partialorder %v1100, 0.0
      %v1280 = vand.u32 %v1100, 2147483648
      %v1281 = vsel %vm1279, %v1280, %v1278
      %v1282 = vrsqrt.pop %v1101
      %v1283 = vmul.f32 %v1282, %v1101
      %v1284 = vmul.f32 %v1283, %v1282
      %v1285 = vmul.f32 0.5, %v1284
      %v1286 = vsub.f32 1.5, %v1285
      %v1287 = vmul.f32 %v1282, %v1286
      %v1288 = vmul.f32 %v1101, %v1287
      %vm1289 = vcmp.eq.f32.partialorder %v1101, inf
      %v1290 = vsel %vm1289, %v1101, %v1288
      %vm1291 = vcmp.eq.f32.partialorder %v1101, 0.0
      %v1292 = vand.u32 %v1101, 2147483648
      %v1293 = vsel %vm1291, %v1292, %v1290
      %v1294 = vadd.f32 %v1113, 0.01
      %v1295 = vadd.f32 %v1125, 0.01
      %v1296 = vadd.f32 %v1137, 0.01
      %v1297 = vadd.f32 %v1149, 0.01
      %v1298 = vadd.f32 %v1161, 0.01
      %v1299 = vadd.f32 %v1173, 0.01
      %v1300 = vadd.f32 %v1185, 0.01
      %v1301 = vadd.f32 %v1197, 0.01
      %v1302 = vadd.f32 %v1209, 0.01
      %v1303 = vadd.f32 %v1221, 0.01
      %v1304 = vadd.f32 %v1233, 0.01
      %v1305 = vadd.f32 %v1245, 0.01
      %v1306 = vadd.f32 %v1257, 0.01
      %v1307 = vadd.f32 %v1269, 0.01
      %v1308 = vadd.f32 %v1281, 0.01
      %v1309 = vadd.f32 %v1293, 0.01
      %v1310 = vrcp.pop %v1294
      %v1311 = vrcp.pop %v1295
      %v1312 = vrcp.pop %v1296
      %v1313 = vrcp.pop %v1297
      %v1314 = vrcp.pop %v1298
      %v1315 = vrcp.pop %v1299
      %v1316 = vrcp.pop %v1300
      %v1317 = vrcp.pop %v1301
      %v1318 = vrcp.pop %v1302
      %v1319 = vrcp.pop %v1303
      %v1320 = vrcp.pop %v1304
      %v1321 = vrcp.pop %v1305
      %v1322 = vrcp.pop %v1306
      %v1323 = vrcp.pop %v1307
      %v1324 = vrcp.pop %v1308
      %v1325 = vrcp.pop %v1309
      %v1326 = vmul.f32 %v1022, %v1310
      %v1327 = vmul.f32 %v1023, %v1311
      %v1328 = vmul.f32 %v1024, %v1312
      %v1329 = vmul.f32 %v1025, %v1313
      %v1330 = vmul.f32 %v1026, %v1314
      %v1331 = vmul.f32 %v1027, %v1315
      %v1332 = vmul.f32 %v1028, %v1316
      %v1333 = vmul.f32 %v1029, %v1317
      %v1334 = vmul.f32 %v1030, %v1318
      %v1335 = vmul.f32 %v1031, %v1319
      %v1336 = vmul.f32 %v1032, %v1320
      %v1337 = vmul.f32 %v1033, %v1321
      %v1338 = vmul.f32 %v1034, %v1322
      %v1339 = vmul.f32 %v1035, %v1323
      %v1340 = vmul.f32 %v1036, %v1324
      %v1341 = vmul.f32 %v1037, %v1325
      %v1342 = vmul.f32 %v1326, %v1020
      %v1343 = vmul.f32 %v1327, %v1020
      %v1344 = vmul.f32 %v1328, %v1020
      %v1345 = vmul.f32 %v1329, %v1020
      %v1346 = vmul.f32 %v1330, %v1020
      %v1347 = vmul.f32 %v1331, %v1020
      %v1348 = vmul.f32 %v1332, %v1020
      %v1349 = vmul.f32 %v1333, %v1020
      %v1350 = vmul.f32 %v1334, %v1020
      %v1351 = vmul.f32 %v1335, %v1020
      %v1352 = vmul.f32 %v1336, %v1020
      %v1353 = vmul.f32 %v1337, %v1020
      %v1354 = vmul.f32 %v1338, %v1020
      %v1355 = vmul.f32 %v1339, %v1020
      %v1356 = vmul.f32 %v1340, %v1020
      %v1357 = vmul.f32 %v1341, %v1020
      %v1358 = vadd.f32 %v698, %v1342
      %v1359 = vadd.f32 %v699, %v1343
      %v1360 = vadd.f32 %v700, %v1344
      %v1361 = vadd.f32 %v701, %v1345
      %v1362 = vadd.f32 %v702, %v1346
      %v1363 = vadd.f32 %v703, %v1347
      %v1364 = vadd.f32 %v704, %v1348
      %v1365 = vadd.f32 %v705, %v1349
      %v1366 = vadd.f32 %v706, %v1350
      %v1367 = vadd.f32 %v707, %v1351
      %v1368 = vadd.f32 %v708, %v1352
      %v1369 = vadd.f32 %v709, %v1353
      %v1370 = vadd.f32 %v710, %v1354
      %v1371 = vadd.f32 %v711, %v1355
      %v1372 = vadd.f32 %v712, %v1356
      %v1373 = vadd.f32 %v713, %v1357
      %1374 = vst [vmem:[%s197] sm:$0xff] %v1358
      %1375 = vst [vmem:[%s197 + $0x8] sm:$0xff] %v1359
      %1376 = vst [vmem:[%s197 + $0x10] sm:$0xff] %v1360
      %1377 = vst [vmem:[%s197 + $0x18] sm:$0xff] %v1361
      %1378 = vst [vmem:[%s197 + $0x20] sm:$0xff] %v1362
      %1379 = vst [vmem:[%s197 + $0x28] sm:$0xff] %v1363
      %1380 = vst [vmem:[%s197 + $0x30] sm:$0xff] %v1364
      %1381 = vst [vmem:[%s197 + $0x38] sm:$0xff] %v1365
      %1382 = vst [vmem:[%s197 + $0x40] sm:$0xff] %v1366
      %1383 = vst [vmem:[%s197 + $0x48] sm:$0xff] %v1367
      %1384 = vst [vmem:[%s197 + $0x50] sm:$0xff] %v1368
      %1385 = vst [vmem:[%s197 + $0x58] sm:$0xff] %v1369
      %1386 = vst [vmem:[%s197 + $0x60] sm:$0xff] %v1370
      %1387 = vst [vmem:[%s197 + $0x68] sm:$0xff] %v1371
      %1388 = vst [vmem:[%s197 + $0x70] sm:$0xff] %v1372
      %1389 = vst [vmem:[%s197 + $0x78] sm:$0xff] %v1373
      %p1390 = scmp.lt.s32.totalorder %s15, 1
      %s1391 = scalar_select %p1390, %s15, 1
      %s1392 = smul.addr %s1391, 16
      %s1393 = smul.addr %s1392, 8
      %s1394 = scalar_lea.vmem %s4, %s1393
      // Predicated region
      $region37: #{llama2_layer_forward.3} parent=35 // pred_check
        %p1395 = pneg %p122
      $region38: #{llama2_layer_forward.3} parent=35 // pred_check_branch
        %1397 = sbr.rel (%p1395) target = $region40
      $region39: #{llama2_layer_forward.3} parent=35 // pred_region
        _
      $region40: #{llama2_layer_forward.3} parent=35 // pred_fallthru
        _
    $region36: #{llama2_layer_forward.3} parent=5 // pred_fallthru
      _
    %p1398 = scmp.le.s32.totalorder 2, %s10
    // Predicated region
    $region41: #{llama2_layer_forward.3} parent=5 // pred_check
      %p1399 = pneg %p1398
    $region42: #{llama2_layer_forward.3} parent=5 // pred_check_branch
      %1401 = sbr.rel (%p1399) target = $region44
    $region43: #{llama2_layer_forward.3} parent=5 // pred_region
      %s1402 = ssub.s32 %s10, 2
      // Predicated region
      $region45: #{llama2_layer_forward.3} parent=43 // pred_check
        %p1403 = pneg %p128
      $region46: #{llama2_layer_forward.3} parent=43 // pred_check_branch
        %1405 = sbr.rel (%p1403) target = $region48
      $region47: #{llama2_layer_forward.3} parent=43 // pred_region
        %p1406 = scmp.lt.s32.totalorder %s16, 1
        %s1407 = scalar_select %p1406, %s16, 1
        %s1408 = smul.addr %s1407, 16
        %s1409 = smul.addr %s1408, 8
        %s1410 = scalar_lea.vmem %s4, %s1409
      $region48: #{llama2_layer_forward.3} parent=43 // pred_fallthru
        _
    $region44: #{llama2_layer_forward.3} parent=5 // pred_fallthru
      _
  $region6: #{llama2_layer_forward.3} parent=0 // loop_footer
    %s14 = sadd.s32 1, %s10
  $region7: #{llama2_layer_forward.3} parent=0 // loop_footer_branch
    %9 = sbr.rel target = $region3
  $region8: #{llama2_layer_forward.3} parent=0 // loop_exit
    _

</llo_original>
